<compile_context>
chip_gen: v6e
topology: v6e:2x2x1
jax: 0.10.0
libtpu: 0.0.40
codegen_flags: <defaults>
</compile_context>

<pallas_src>
import jax
import jax.numpy as jnp
import numpy as np
from jax.experimental import pallas as pl
from jax.experimental.pallas import tpu as pltpu

# ---- configuration (small, synthetic) --------------------------------------
B = 2          # batch
LQ = 8         # query sequence length
LK = 16        # key/value (cross-attention) sequence length
E = 32         # hidden_size
H = 4          # num_attention_heads
D = E // H     # head_dim
I = 64         # intermediate_size
EPS = 1e-6     # layer_norm_eps
SCALE = D ** -0.5

# Row layout of the packed 1-row parameter slab (13, 128) f32.
R_LN1_W, R_LN1_B, R_LN2_W, R_LN2_B = 0, 1, 2, 3
R_QN_W, R_QN_B, R_KN_W, R_KN_B = 4, 5, 6, 7
R_BQKV, R_BO, R_B1, R_B2, R_GATES = 8, 9, 10, 11, 12
P_ROWS, P_LANES = 13, 128


def _layernorm(x, w, b):
    mu = jnp.mean(x, axis=-1, keepdims=True)
    var = jnp.mean((x - mu) ** 2, axis=-1, keepdims=True)
    return (x - mu) * jax.lax.rsqrt(var + EPS) * w + b


def _gelu_tanh(x):
    # gelu_pytorch_tanh
    return 0.5 * x * (1.0 + jnp.tanh(0.7978845608028654 * (x + 0.044715 * x * x * x)))


def cross_attn_layer_kernel(hs_ref, xs_ref, mask_ref, wqkv_ref, wo_ref,
                            w1_ref, w2_ref, pv_ref, out_ref):
    f32, bf16 = jnp.float32, jnp.bfloat16

    # ---- packed 1-row params: static slices of one VMEM slab ----------------
    ln1_w = pv_ref[R_LN1_W:R_LN1_W + 1, :E]
    ln1_b = pv_ref[R_LN1_B:R_LN1_B + 1, :E]
    ln2_w = pv_ref[R_LN2_W:R_LN2_W + 1, :E]
    ln2_b = pv_ref[R_LN2_B:R_LN2_B + 1, :E]
    qn_w = pv_ref[R_QN_W:R_QN_W + 1, :D]
    qn_b = pv_ref[R_QN_B:R_QN_B + 1, :D]
    kn_w = pv_ref[R_KN_W:R_KN_W + 1, :D]
    kn_b = pv_ref[R_KN_B:R_KN_B + 1, :D]
    bqkv = pv_ref[R_BQKV:R_BQKV + 1, :3 * E]
    bo = pv_ref[R_BO:R_BO + 1, :E]
    b1 = pv_ref[R_B1:R_B1 + 1, :I]
    b2 = pv_ref[R_B2:R_B2 + 1, :E]

    # Sigmoid gates: computed once, on the vector/EUP path.
    g = jax.nn.sigmoid(pv_ref[R_GATES:R_GATES + 1, 0:2])
    g_attn = g[:, 0:1]
    g_mlp = g[:, 1:2]

    # ---- layer_norm1 + fused q/k/v projection -------------------------------
    h = hs_ref[...]                                        # (B*LQ, E) f32, residual
    hn = _layernorm(h, ln1_w, ln1_b)

    # One MXU pass for all three projections: rows = [normed queries ; xs],
    # columns = [Wq | Wk | Wv].  Off-diagonal products are simply discarded.
    x_all = jnp.concatenate([hn.astype(bf16), xs_ref[...].astype(bf16)], axis=0)
    y = jnp.dot(x_all, wqkv_ref[...], preferred_element_type=f32) + bqkv
    q2 = y[:B * LQ, 0:E]                                   # (B*LQ, E)
    k2 = y[B * LQ:, E:2 * E]                               # (B*LK, E)
    v2 = y[B * LQ:, 2 * E:3 * E]                           # (B*LK, E)

    # ---- split heads: (rows, E) -> (B*H, seq, D), n = b*H + h ---------------
    def split_heads(x2d, seq):
        parts = [x2d[b * seq:(b + 1) * seq, hh * D:(hh + 1) * D]
                 for b in range(B) for hh in range(H)]
        return jnp.stack(parts, axis=0)                    # (B*H, seq, D)

    qh = split_heads(q2, LQ)
    kh = split_heads(k2, LK)
    vh = split_heads(v2, LK)

    # ---- per-head q/k LayerNorm (f32) ----------------------------------------
    qn = _layernorm(qh, qn_w, qn_b)
    kn = _layernorm(kh, kn_w, kn_b)

    # ---- scores + masked softmax (f32, exact) --------------------------------
    s = jnp.einsum("nqd,nkd->nqk", qn.astype(bf16), kn.astype(bf16),
                   preferred_element_type=f32) * SCALE     # (B*H, LQ, LK)
    s = s.reshape(B, H, LQ, LK) + mask_ref[...]            # mask (B,1,LQ,LK) bcast over H
    s = s - jnp.max(s, axis=-1, keepdims=True)
    p = jnp.exp(s)
    p = p / jnp.sum(p, axis=-1, keepdims=True)             # exact division
    p = p.reshape(B * H, LQ, LK).astype(bf16)

    # ---- attention output, merge heads, out_proj ------------------------------
    o = jnp.einsum("nqk,nkd->nqd", p, vh.astype(bf16),
                   preferred_element_type=f32)             # (B*H, LQ, D)
    attn = jnp.concatenate(
        [jnp.concatenate([o[b * H + hh] for hh in range(H)], axis=-1)
         for b in range(B)], axis=0)                       # (B*LQ, E)
    attn = jnp.dot(attn.astype(bf16), wo_ref[...],
                   preferred_element_type=f32) + bo

    h1 = h + g_attn * attn

    # ---- layer_norm2 + MLP (gelu_pytorch_tanh) --------------------------------
    h2 = _layernorm(h1, ln2_w, ln2_b)
    f1 = jnp.dot(h2.astype(bf16), w1_ref[...], preferred_element_type=f32) + b1
    f1 = _gelu_tanh(f1)
    f2 = jnp.dot(f1.astype(bf16), w2_ref[...], preferred_element_type=f32) + b2

    out_ref[...] = h1 + g_mlp * f2


@jax.jit
def cross_attention_layer(hidden_states, cross_attention_states,
                          cross_attention_mask, wqkv, wo, w1, w2, pvec):
    hs_2d = hidden_states.reshape(B * LQ, E)
    xs_2d = cross_attention_states.reshape(B * LK, E)
    out = pl.pallas_call(
        cross_attn_layer_kernel,
        out_shape=jax.ShapeDtypeStruct((B * LQ, E), jnp.float32),
        in_specs=[pl.BlockSpec(memory_space=pltpu.MemorySpace.VMEM)] * 8,
        out_specs=pl.BlockSpec(memory_space=pltpu.MemorySpace.VMEM),
    )(hs_2d, xs_2d, cross_attention_mask, wqkv, wo, w1, w2, pvec)
    return out.reshape(B, LQ, E)


# ---- deterministic parameter init (synthetic) --------------------------------
def init_params(key):
    ks = jax.random.split(key, 6)

    def lin(k, din, dout):
        # weight stored as (in, out): y = x @ W + b
        w = jax.random.normal(k, (din, dout), jnp.float32) * (din ** -0.5)
        b = jax.random.normal(jax.random.fold_in(k, 1), (1, dout), jnp.float32) * 0.01
        return w, b

    wq, bq = lin(ks[0], E, E)
    wk, bk = lin(ks[1], E, E)
    wv, bv = lin(ks[2], E, E)
    wo, bo = lin(ks[3], E, E)
    w1, b1 = lin(ks[4], E, I)
    w2, b2 = lin(ks[5], I, E)

    return {
        "ln1_w": jnp.ones((1, E), jnp.float32), "ln1_b": jnp.zeros((1, E), jnp.float32),
        "wq": wq, "bq": bq, "wk": wk, "bk": bk, "wv": wv, "bv": bv,
        "qn_w": jnp.ones((1, D), jnp.float32), "qn_b": jnp.zeros((1, D), jnp.float32),
        "kn_w": jnp.ones((1, D), jnp.float32), "kn_b": jnp.zeros((1, D), jnp.float32),
        "wo": wo, "bo": bo,
        "attn_gate": jnp.zeros((1,), jnp.float32),   # nn.Parameter(torch.zeros(1))
        "ln2_w": jnp.ones((1, E), jnp.float32), "ln2_b": jnp.zeros((1, E), jnp.float32),
        "w1": w1, "b1": b1, "w2": w2, "b2": b2,
        "mlp_gate": jnp.zeros((1,), jnp.float32),
    }


def pack_params(p):
    """Build the kernel operands ONCE (outside jit): fused weight slabs + the
    single packed 1-row-parameter slab.  Nothing here runs per forward call."""
    pvec = np.zeros((P_ROWS, P_LANES), np.float32)

    def put(row, v):
        v = np.asarray(v, np.float32).reshape(-1)
        pvec[row, :v.shape[0]] = v

    put(R_LN1_W, p["ln1_w"]); put(R_LN1_B, p["ln1_b"])
    put(R_LN2_W, p["ln2_w"]); put(R_LN2_B, p["ln2_b"])
    put(R_QN_W, p["qn_w"]);   put(R_QN_B, p["qn_b"])
    put(R_KN_W, p["kn_w"]);   put(R_KN_B, p["kn_b"])
    put(R_BQKV, np.concatenate([np.asarray(p["bq"]).ravel(),
                                np.asarray(p["bk"]).ravel(),
                                np.asarray(p["bv"]).ravel()]))
    put(R_BO, p["bo"]); put(R_B1, p["b1"]); put(R_B2, p["b2"])
    pvec[R_GATES, 0] = float(np.asarray(p["attn_gate"])[0])
    pvec[R_GATES, 1] = float(np.asarray(p["mlp_gate"])[0])

    return {
        "pvec": jnp.asarray(pvec),
        "wqkv": jnp.concatenate([p["wq"], p["wk"], p["wv"]], axis=1).astype(jnp.bfloat16),
        "wo": p["wo"].astype(jnp.bfloat16),
        "w1": p["w1"].astype(jnp.bfloat16),
        "w2": p["w2"].astype(jnp.bfloat16),
    }


# ---- pure-JAX f32 reference for correctness check -----------------------------
def reference(hs, xs, mask4, p):
    def ln(x, w, b):
        mu = x.mean(-1, keepdims=True)
        var = ((x - mu) ** 2).mean(-1, keepdims=True)
        return (x - mu) / jnp.sqrt(var + EPS) * w + b

    residual = hs
    h = ln(hs, p["ln1_w"][0], p["ln1_b"][0])
    q = h @ p["wq"] + p["bq"][0]
    k = xs @ p["wk"] + p["bk"][0]
    v = xs @ p["wv"] + p["bv"][0]
    q = q.reshape(B, LQ, H, D).transpose(0, 2, 1, 3)
    k = k.reshape(B, LK, H, D).transpose(0, 2, 1, 3)
    v = v.reshape(B, LK, H, D).transpose(0, 2, 1, 3)
    q = ln(q, p["qn_w"][0], p["qn_b"][0])
    k = ln(k, p["kn_w"][0], p["kn_b"][0])
    s = jnp.einsum("bhqd,bhkd->bhqk", q, k) * SCALE + mask4
    w = jax.nn.softmax(s, axis=-1)
    o = jnp.einsum("bhqk,bhkd->bhqd", w, v)
    o = o.transpose(0, 2, 1, 3).reshape(B, LQ, E)
    o = o @ p["wo"] + p["bo"][0]
    h1 = residual + jax.nn.sigmoid(p["attn_gate"][0]) * o

    h2 = ln(h1, p["ln2_w"][0], p["ln2_b"][0])
    f = h2 @ p["w1"] + p["b1"][0]
    f = 0.5 * f * (1.0 + jnp.tanh(0.7978845608028654 * (f + 0.044715 * f ** 3)))
    f = f @ p["w2"] + p["b2"][0]
    return h1 + jax.nn.sigmoid(p["mlp_gate"][0]) * f


if __name__ == "__main__":
    key = jax.random.PRNGKey(0)
    k_h, k_x, k_m, k_p = jax.random.split(key, 4)

    hidden_states = jax.random.normal(k_h, (B, LQ, E), jnp.float32)
    cross_attention_states = jax.random.normal(k_x, (B, LK, E), jnp.float32)
    # additive mask (B, 1, LQ, LK): mask out a few kv positions per batch
    keep = jax.random.bernoulli(k_m, 0.8, (B, 1, LQ, LK))
    cross_attention_mask = jnp.where(keep, 0.0, -1e9).astype(jnp.float32)

    params = init_params(k_p)
    packed = pack_params(params)   # built once, outside jit

    out = cross_attention_layer(hidden_states, cross_attention_states,
                                cross_attention_mask, packed["wqkv"],
                                packed["wo"], packed["w1"], packed["w2"],
                                packed["pvec"])
    out = jax.block_until_ready(out)

    ref = reference(hidden_states, cross_attention_states, cross_attention_mask, params)
    # Tolerance loosened because MXU inputs are bf16 (f32 accumulation).
    np.testing.assert_allclose(np.asarray(out), np.asarray(ref), rtol=3e-2, atol=3e-2)

    print("KERNEL_OK")
</pallas_src>

<mosaic_0001>
module attributes {stable_mosaic.version = 11 : i64} {
  func.func @cross_attn_layer_kernel(%arg0: memref<16x32xf32, #tpu.memory_space<vmem>>, %arg1: memref<32x32xf32, #tpu.memory_space<vmem>>, %arg2: memref<2x1x8x16xf32, #tpu.memory_space<vmem>>, %arg3: memref<32x96xbf16, #tpu.memory_space<vmem>>, %arg4: memref<32x32xbf16, #tpu.memory_space<vmem>>, %arg5: memref<32x64xbf16, #tpu.memory_space<vmem>>, %arg6: memref<64x32xbf16, #tpu.memory_space<vmem>>, %arg7: memref<13x128xf32, #tpu.memory_space<vmem>>, %arg8: memref<16x32xf32, #tpu.memory_space<vmem>>) attributes {dimension_semantics = [], scalar_prefetch = 0 : i64, scratch_operands = 0 : i64, tpu.core_type = #tpu.core_type<tc>} {
    %c0 = arith.constant 0 : index
    %c0_0 = arith.constant 0 : index
    %0 = vector.load %arg7[%c0, %c0_0] : memref<13x128xf32, #tpu.memory_space<vmem>>, vector<1x32xf32>
    %c1 = arith.constant 1 : index
    %c0_1 = arith.constant 0 : index
    %1 = vector.load %arg7[%c1, %c0_1] : memref<13x128xf32, #tpu.memory_space<vmem>>, vector<1x32xf32>
    %c2 = arith.constant 2 : index
    %c0_2 = arith.constant 0 : index
    %2 = vector.load %arg7[%c2, %c0_2] : memref<13x128xf32, #tpu.memory_space<vmem>>, vector<1x32xf32>
    %c3 = arith.constant 3 : index
    %c0_3 = arith.constant 0 : index
    %3 = vector.load %arg7[%c3, %c0_3] : memref<13x128xf32, #tpu.memory_space<vmem>>, vector<1x32xf32>
    %c4 = arith.constant 4 : index
    %c0_4 = arith.constant 0 : index
    %4 = vector.load %arg7[%c4, %c0_4] : memref<13x128xf32, #tpu.memory_space<vmem>>, vector<1x8xf32>
    %c5 = arith.constant 5 : index
    %c0_5 = arith.constant 0 : index
    %5 = vector.load %arg7[%c5, %c0_5] : memref<13x128xf32, #tpu.memory_space<vmem>>, vector<1x8xf32>
    %c6 = arith.constant 6 : index
    %c0_6 = arith.constant 0 : index
    %6 = vector.load %arg7[%c6, %c0_6] : memref<13x128xf32, #tpu.memory_space<vmem>>, vector<1x8xf32>
    %c7 = arith.constant 7 : index
    %c0_7 = arith.constant 0 : index
    %7 = vector.load %arg7[%c7, %c0_7] : memref<13x128xf32, #tpu.memory_space<vmem>>, vector<1x8xf32>
    %c8 = arith.constant 8 : index
    %c0_8 = arith.constant 0 : index
    %8 = vector.load %arg7[%c8, %c0_8] : memref<13x128xf32, #tpu.memory_space<vmem>>, vector<1x96xf32>
    %c9 = arith.constant 9 : index
    %c0_9 = arith.constant 0 : index
    %9 = vector.load %arg7[%c9, %c0_9] : memref<13x128xf32, #tpu.memory_space<vmem>>, vector<1x32xf32>
    %c10 = arith.constant 10 : index
    %c0_10 = arith.constant 0 : index
    %10 = vector.load %arg7[%c10, %c0_10] : memref<13x128xf32, #tpu.memory_space<vmem>>, vector<1x64xf32>
    %c11 = arith.constant 11 : index
    %c0_11 = arith.constant 0 : index
    %11 = vector.load %arg7[%c11, %c0_11] : memref<13x128xf32, #tpu.memory_space<vmem>>, vector<1x32xf32>
    %c12 = arith.constant 12 : index
    %c0_12 = arith.constant 0 : index
    %12 = vector.load %arg7[%c12, %c0_12] : memref<13x128xf32, #tpu.memory_space<vmem>>, vector<1x2xf32>
    %13 = arith.negf %12 : vector<1x2xf32>
    %14 = math.exp %13 : vector<1x2xf32>
    %cst = arith.constant 1.000000e+00 : f32
    %15 = vector.broadcast %cst : f32 to vector<1x2xf32>
    %16 = arith.addf %15, %14 : vector<1x2xf32>
    %17 = arith.divf %15, %16 : vector<1x2xf32>
    %18 = vector.extract_strided_slice %17 {offsets = [0, 0], sizes = [1, 1], strides = [1, 1]} : vector<1x2xf32> to vector<1x1xf32>
    %19 = vector.extract_strided_slice %17 {offsets = [0, 1], sizes = [1, 1], strides = [1, 1]} : vector<1x2xf32> to vector<1x1xf32>
    %c0_13 = arith.constant 0 : index
    %c0_14 = arith.constant 0 : index
    %20 = vector.load %arg0[%c0_13, %c0_14] : memref<16x32xf32, #tpu.memory_space<vmem>>, vector<16x32xf32>
    %cst_15 = arith.constant dense<0.000000e+00> : vector<16xf32>
    %21 = vector.multi_reduction <add>, %20, %cst_15 [1] : vector<16x32xf32> to vector<16xf32>
    %22 = vector.shape_cast %21 : vector<16xf32> to vector<16x1xf32>
    %cst_16 = arith.constant 3.200000e+01 : f32
    %23 = vector.broadcast %cst_16 : f32 to vector<16x1xf32>
    %24 = arith.divf %22, %23 : vector<16x1xf32>
    %25 = vector.broadcast %24 : vector<16x1xf32> to vector<16x32xf32>
    %26 = arith.subf %20, %25 : vector<16x32xf32>
    %27 = arith.mulf %26, %26 : vector<16x32xf32>
    %cst_17 = arith.constant dense<0.000000e+00> : vector<16xf32>
    %28 = vector.multi_reduction <add>, %27, %cst_17 [1] : vector<16x32xf32> to vector<16xf32>
    %29 = vector.shape_cast %28 : vector<16xf32> to vector<16x1xf32>
    %cst_18 = arith.constant 3.200000e+01 : f32
    %30 = vector.broadcast %cst_18 : f32 to vector<16x1xf32>
    %31 = arith.divf %29, %30 : vector<16x1xf32>
    %32 = vector.broadcast %24 : vector<16x1xf32> to vector<16x32xf32>
    %33 = arith.subf %20, %32 : vector<16x32xf32>
    %cst_19 = arith.constant 9.99999997E-7 : f32
    %34 = vector.broadcast %cst_19 : f32 to vector<16x1xf32>
    %35 = arith.addf %31, %34 : vector<16x1xf32>
    %36 = math.rsqrt %35 : vector<16x1xf32>
    %37 = vector.broadcast %36 : vector<16x1xf32> to vector<16x32xf32>
    %38 = arith.mulf %33, %37 : vector<16x32xf32>
    %39 = vector.broadcast %0 : vector<1x32xf32> to vector<16x32xf32>
    %40 = arith.mulf %38, %39 : vector<16x32xf32>
    %41 = vector.broadcast %1 : vector<1x32xf32> to vector<16x32xf32>
    %42 = arith.addf %40, %41 : vector<16x32xf32>
    %43 = arith.truncf %42 : vector<16x32xf32> to vector<16x32xbf16>
    %c0_20 = arith.constant 0 : index
    %c0_21 = arith.constant 0 : index
    %44 = vector.load %arg1[%c0_20, %c0_21] : memref<32x32xf32, #tpu.memory_space<vmem>>, vector<32x32xf32>
    %45 = arith.truncf %44 : vector<32x32xf32> to vector<32x32xbf16>
    %46 = tpu.concatenate %43, %45 in 0 : vector<16x32xbf16>, vector<32x32xbf16> -> vector<48x32xbf16>
    %c0_22 = arith.constant 0 : index
    %c0_23 = arith.constant 0 : index
    %47 = vector.load %arg3[%c0_22, %c0_23] : memref<32x96xbf16, #tpu.memory_space<vmem>>, vector<32x96xbf16>
    %cst_24 = arith.constant dense<0.000000e+00> : vector<48x96xf32>
    %48 = tpu.matmul %46, %47, %cst_24 {dimension_numbers = #tpu.dot_dimension_numbers<[1], [0], [0], [1], [0, 0, 1, 1], [], []>} : vector<48x32xbf16>, vector<32x96xbf16>, vector<48x96xf32> -> vector<48x96xf32>
    %49 = vector.broadcast %8 : vector<1x96xf32> to vector<48x96xf32>
    %50 = arith.addf %48, %49 : vector<48x96xf32>
    %51 = vector.extract_strided_slice %50 {offsets = [0, 0], sizes = [16, 32], strides = [1, 1]} : vector<48x96xf32> to vector<16x32xf32>
    %52 = vector.extract_strided_slice %50 {offsets = [16, 32], sizes = [32, 32], strides = [1, 1]} : vector<48x96xf32> to vector<32x32xf32>
    %53 = vector.extract_strided_slice %50 {offsets = [16, 64], sizes = [32, 32], strides = [1, 1]} : vector<48x96xf32> to vector<32x32xf32>
    %54 = vector.extract_strided_slice %51 {offsets = [0, 0], sizes = [8, 8], strides = [1, 1]} : vector<16x32xf32> to vector<8x8xf32>
    %55 = vector.extract_strided_slice %51 {offsets = [0, 8], sizes = [8, 8], strides = [1, 1]} : vector<16x32xf32> to vector<8x8xf32>
    %56 = vector.extract_strided_slice %51 {offsets = [0, 16], sizes = [8, 8], strides = [1, 1]} : vector<16x32xf32> to vector<8x8xf32>
    %57 = vector.extract_strided_slice %51 {offsets = [0, 24], sizes = [8, 8], strides = [1, 1]} : vector<16x32xf32> to vector<8x8xf32>
    %58 = vector.extract_strided_slice %51 {offsets = [8, 0], sizes = [8, 8], strides = [1, 1]} : vector<16x32xf32> to vector<8x8xf32>
    %59 = vector.extract_strided_slice %51 {offsets = [8, 8], sizes = [8, 8], strides = [1, 1]} : vector<16x32xf32> to vector<8x8xf32>
    %60 = vector.extract_strided_slice %51 {offsets = [8, 16], sizes = [8, 8], strides = [1, 1]} : vector<16x32xf32> to vector<8x8xf32>
    %61 = vector.extract_strided_slice %51 {offsets = [8, 24], sizes = [8, 8], strides = [1, 1]} : vector<16x32xf32> to vector<8x8xf32>
    %62 = vector.shape_cast %54 : vector<8x8xf32> to vector<1x8x8xf32>
    %63 = vector.shape_cast %55 : vector<8x8xf32> to vector<1x8x8xf32>
    %64 = vector.shape_cast %56 : vector<8x8xf32> to vector<1x8x8xf32>
    %65 = vector.shape_cast %57 : vector<8x8xf32> to vector<1x8x8xf32>
    %66 = vector.shape_cast %58 : vector<8x8xf32> to vector<1x8x8xf32>
    %67 = vector.shape_cast %59 : vector<8x8xf32> to vector<1x8x8xf32>
    %68 = vector.shape_cast %60 : vector<8x8xf32> to vector<1x8x8xf32>
    %69 = vector.shape_cast %61 : vector<8x8xf32> to vector<1x8x8xf32>
    %70 = tpu.concatenate %62, %63, %64, %65, %66, %67, %68, %69 in 0 : vector<1x8x8xf32>, vector<1x8x8xf32>, vector<1x8x8xf32>, vector<1x8x8xf32>, vector<1x8x8xf32>, vector<1x8x8xf32>, vector<1x8x8xf32>, vector<1x8x8xf32> -> vector<8x8x8xf32>
    %71 = vector.extract_strided_slice %52 {offsets = [0, 0], sizes = [16, 8], strides = [1, 1]} : vector<32x32xf32> to vector<16x8xf32>
    %72 = vector.extract_strided_slice %52 {offsets = [0, 8], sizes = [16, 8], strides = [1, 1]} : vector<32x32xf32> to vector<16x8xf32>
    %73 = vector.extract_strided_slice %52 {offsets = [0, 16], sizes = [16, 8], strides = [1, 1]} : vector<32x32xf32> to vector<16x8xf32>
    %74 = vector.extract_strided_slice %52 {offsets = [0, 24], sizes = [16, 8], strides = [1, 1]} : vector<32x32xf32> to vector<16x8xf32>
    %75 = vector.extract_strided_slice %52 {offsets = [16, 0], sizes = [16, 8], strides = [1, 1]} : vector<32x32xf32> to vector<16x8xf32>
    %76 = vector.extract_strided_slice %52 {offsets = [16, 8], sizes = [16, 8], strides = [1, 1]} : vector<32x32xf32> to vector<16x8xf32>
    %77 = vector.extract_strided_slice %52 {offsets = [16, 16], sizes = [16, 8], strides = [1, 1]} : vector<32x32xf32> to vector<16x8xf32>
    %78 = vector.extract_strided_slice %52 {offsets = [16, 24], sizes = [16, 8], strides = [1, 1]} : vector<32x32xf32> to vector<16x8xf32>
    %79 = vector.shape_cast %71 : vector<16x8xf32> to vector<1x16x8xf32>
    %80 = vector.shape_cast %72 : vector<16x8xf32> to vector<1x16x8xf32>
    %81 = vector.shape_cast %73 : vector<16x8xf32> to vector<1x16x8xf32>
    %82 = vector.shape_cast %74 : vector<16x8xf32> to vector<1x16x8xf32>
    %83 = vector.shape_cast %75 : vector<16x8xf32> to vector<1x16x8xf32>
    %84 = vector.shape_cast %76 : vector<16x8xf32> to vector<1x16x8xf32>
    %85 = vector.shape_cast %77 : vector<16x8xf32> to vector<1x16x8xf32>
    %86 = vector.shape_cast %78 : vector<16x8xf32> to vector<1x16x8xf32>
    %87 = tpu.concatenate %79, %80, %81, %82, %83, %84, %85, %86 in 0 : vector<1x16x8xf32>, vector<1x16x8xf32>, vector<1x16x8xf32>, vector<1x16x8xf32>, vector<1x16x8xf32>, vector<1x16x8xf32>, vector<1x16x8xf32>, vector<1x16x8xf32> -> vector<8x16x8xf32>
    %88 = vector.extract_strided_slice %53 {offsets = [0, 0], sizes = [16, 8], strides = [1, 1]} : vector<32x32xf32> to vector<16x8xf32>
    %89 = vector.extract_strided_slice %53 {offsets = [0, 8], sizes = [16, 8], strides = [1, 1]} : vector<32x32xf32> to vector<16x8xf32>
    %90 = vector.extract_strided_slice %53 {offsets = [0, 16], sizes = [16, 8], strides = [1, 1]} : vector<32x32xf32> to vector<16x8xf32>
    %91 = vector.extract_strided_slice %53 {offsets = [0, 24], sizes = [16, 8], strides = [1, 1]} : vector<32x32xf32> to vector<16x8xf32>
    %92 = vector.extract_strided_slice %53 {offsets = [16, 0], sizes = [16, 8], strides = [1, 1]} : vector<32x32xf32> to vector<16x8xf32>
    %93 = vector.extract_strided_slice %53 {offsets = [16, 8], sizes = [16, 8], strides = [1, 1]} : vector<32x32xf32> to vector<16x8xf32>
    %94 = vector.extract_strided_slice %53 {offsets = [16, 16], sizes = [16, 8], strides = [1, 1]} : vector<32x32xf32> to vector<16x8xf32>
    %95 = vector.extract_strided_slice %53 {offsets = [16, 24], sizes = [16, 8], strides = [1, 1]} : vector<32x32xf32> to vector<16x8xf32>
    %96 = vector.shape_cast %88 : vector<16x8xf32> to vector<1x16x8xf32>
    %97 = vector.shape_cast %89 : vector<16x8xf32> to vector<1x16x8xf32>
    %98 = vector.shape_cast %90 : vector<16x8xf32> to vector<1x16x8xf32>
    %99 = vector.shape_cast %91 : vector<16x8xf32> to vector<1x16x8xf32>
    %100 = vector.shape_cast %92 : vector<16x8xf32> to vector<1x16x8xf32>
    %101 = vector.shape_cast %93 : vector<16x8xf32> to vector<1x16x8xf32>
    %102 = vector.shape_cast %94 : vector<16x8xf32> to vector<1x16x8xf32>
    %103 = vector.shape_cast %95 : vector<16x8xf32> to vector<1x16x8xf32>
    %104 = tpu.concatenate %96, %97, %98, %99, %100, %101, %102, %103 in 0 : vector<1x16x8xf32>, vector<1x16x8xf32>, vector<1x16x8xf32>, vector<1x16x8xf32>, vector<1x16x8xf32>, vector<1x16x8xf32>, vector<1x16x8xf32>, vector<1x16x8xf32> -> vector<8x16x8xf32>
    %cst_25 = arith.constant dense<0.000000e+00> : vector<8x8xf32>
    %105 = vector.multi_reduction <add>, %70, %cst_25 [2] : vector<8x8x8xf32> to vector<8x8xf32>
    %106 = vector.shape_cast %105 : vector<8x8xf32> to vector<8x8x1xf32>
    %cst_26 = arith.constant 8.000000e+00 : f32
    %107 = vector.broadcast %cst_26 : f32 to vector<8x8x1xf32>
    %108 = arith.divf %106, %107 : vector<8x8x1xf32>
    %109 = vector.broadcast %108 : vector<8x8x1xf32> to vector<8x8x8xf32>
    %110 = arith.subf %70, %109 : vector<8x8x8xf32>
    %111 = arith.mulf %110, %110 : vector<8x8x8xf32>
    %cst_27 = arith.constant dense<0.000000e+00> : vector<8x8xf32>
    %112 = vector.multi_reduction <add>, %111, %cst_27 [2] : vector<8x8x8xf32> to vector<8x8xf32>
    %113 = vector.shape_cast %112 : vector<8x8xf32> to vector<8x8x1xf32>
    %cst_28 = arith.constant 8.000000e+00 : f32
    %114 = vector.broadcast %cst_28 : f32 to vector<8x8x1xf32>
    %115 = arith.divf %113, %114 : vector<8x8x1xf32>
    %116 = vector.broadcast %108 : vector<8x8x1xf32> to vector<8x8x8xf32>
    %117 = arith.subf %70, %116 : vector<8x8x8xf32>
    %cst_29 = arith.constant 9.99999997E-7 : f32
    %118 = vector.broadcast %cst_29 : f32 to vector<8x8x1xf32>
    %119 = arith.addf %115, %118 : vector<8x8x1xf32>
    %120 = math.rsqrt %119 : vector<8x8x1xf32>
    %121 = vector.broadcast %120 : vector<8x8x1xf32> to vector<8x8x8xf32>
    %122 = arith.mulf %117, %121 : vector<8x8x8xf32>
    %123 = vector.shape_cast %4 : vector<1x8xf32> to vector<1x1x8xf32>
    %124 = vector.broadcast %123 : vector<1x1x8xf32> to vector<8x8x8xf32>
    %125 = arith.mulf %122, %124 : vector<8x8x8xf32>
    %126 = vector.shape_cast %5 : vector<1x8xf32> to vector<1x1x8xf32>
    %127 = vector.broadcast %126 : vector<1x1x8xf32> to vector<8x8x8xf32>
    %128 = arith.addf %125, %127 : vector<8x8x8xf32>
    %cst_30 = arith.constant dense<0.000000e+00> : vector<8x16xf32>
    %129 = vector.multi_reduction <add>, %87, %cst_30 [2] : vector<8x16x8xf32> to vector<8x16xf32>
    %130 = vector.shape_cast %129 : vector<8x16xf32> to vector<8x16x1xf32>
    %cst_31 = arith.constant 8.000000e+00 : f32
    %131 = vector.broadcast %cst_31 : f32 to vector<8x16x1xf32>
    %132 = arith.divf %130, %131 : vector<8x16x1xf32>
    %133 = vector.broadcast %132 : vector<8x16x1xf32> to vector<8x16x8xf32>
    %134 = arith.subf %87, %133 : vector<8x16x8xf32>
    %135 = arith.mulf %134, %134 : vector<8x16x8xf32>
    %cst_32 = arith.constant dense<0.000000e+00> : vector<8x16xf32>
    %136 = vector.multi_reduction <add>, %135, %cst_32 [2] : vector<8x16x8xf32> to vector<8x16xf32>
    %137 = vector.shape_cast %136 : vector<8x16xf32> to vector<8x16x1xf32>
    %cst_33 = arith.constant 8.000000e+00 : f32
    %138 = vector.broadcast %cst_33 : f32 to vector<8x16x1xf32>
    %139 = arith.divf %137, %138 : vector<8x16x1xf32>
    %140 = vector.broadcast %132 : vector<8x16x1xf32> to vector<8x16x8xf32>
    %141 = arith.subf %87, %140 : vector<8x16x8xf32>
    %cst_34 = arith.constant 9.99999997E-7 : f32
    %142 = vector.broadcast %cst_34 : f32 to vector<8x16x1xf32>
    %143 = arith.addf %139, %142 : vector<8x16x1xf32>
    %144 = math.rsqrt %143 : vector<8x16x1xf32>
    %145 = vector.broadcast %144 : vector<8x16x1xf32> to vector<8x16x8xf32>
    %146 = arith.mulf %141, %145 : vector<8x16x8xf32>
    %147 = vector.shape_cast %6 : vector<1x8xf32> to vector<1x1x8xf32>
    %148 = vector.broadcast %147 : vector<1x1x8xf32> to vector<8x16x8xf32>
    %149 = arith.mulf %146, %148 : vector<8x16x8xf32>
    %150 = vector.shape_cast %7 : vector<1x8xf32> to vector<1x1x8xf32>
    %151 = vector.broadcast %150 : vector<1x1x8xf32> to vector<8x16x8xf32>
    %152 = arith.addf %149, %151 : vector<8x16x8xf32>
    %153 = arith.truncf %128 : vector<8x8x8xf32> to vector<8x8x8xbf16>
    %154 = arith.truncf %152 : vector<8x16x8xf32> to vector<8x16x8xbf16>
    "tpu.trace_start"() <{level = 10 : i32, message = "nqd,nkd->nqk"}> : () -> ()
    %cst_35 = arith.constant dense<0.000000e+00> : vector<8x8x16xf32>
    %155 = tpu.matmul %153, %154, %cst_35 {dimension_numbers = #tpu.dot_dimension_numbers<[2], [2], [1], [1], [0, 0, 0, 1, 1, 1], [0], [0]>} : vector<8x8x8xbf16>, vector<8x16x8xbf16>, vector<8x8x16xf32> -> vector<8x8x16xf32>
    "tpu.trace_stop"() : () -> ()
    %cst_36 = arith.constant 0.353553385 : f32
    %156 = vector.broadcast %cst_36 : f32 to vector<8x8x16xf32>
    %157 = arith.mulf %155, %156 : vector<8x8x16xf32>
    %158 = vector.shape_cast %157 : vector<8x8x16xf32> to vector<2x4x8x16xf32>
    %c0_37 = arith.constant 0 : index
    %c0_38 = arith.constant 0 : index
    %c0_39 = arith.constant 0 : index
    %c0_40 = arith.constant 0 : index
    %159 = vector.load %arg2[%c0_37, %c0_38, %c0_39, %c0_40] : memref<2x1x8x16xf32, #tpu.memory_space<vmem>>, vector<2x1x8x16xf32>
    %160 = vector.broadcast %159 : vector<2x1x8x16xf32> to vector<2x4x8x16xf32>
    %161 = arith.addf %158, %160 : vector<2x4x8x16xf32>
    %cst_41 = arith.constant dense<0xFF800000> : vector<2x4x8xf32>
    %162 = vector.multi_reduction <maximumf>, %161, %cst_41 [3] : vector<2x4x8x16xf32> to vector<2x4x8xf32>
    %163 = vector.shape_cast %162 : vector<2x4x8xf32> to vector<2x4x8x1xf32>
    %164 = vector.broadcast %163 : vector<2x4x8x1xf32> to vector<2x4x8x16xf32>
    %165 = arith.subf %161, %164 : vector<2x4x8x16xf32>
    %166 = math.exp %165 : vector<2x4x8x16xf32>
    %cst_42 = arith.constant dense<0.000000e+00> : vector<2x4x8xf32>
    %167 = vector.multi_reduction <add>, %166, %cst_42 [3] : vector<2x4x8x16xf32> to vector<2x4x8xf32>
    %168 = vector.shape_cast %167 : vector<2x4x8xf32> to vector<2x4x8x1xf32>
    %169 = vector.broadcast %168 : vector<2x4x8x1xf32> to vector<2x4x8x16xf32>
    %170 = arith.divf %166, %169 : vector<2x4x8x16xf32>
    %171 = vector.shape_cast %170 : vector<2x4x8x16xf32> to vector<8x8x16xf32>
    %172 = arith.truncf %171 : vector<8x8x16xf32> to vector<8x8x16xbf16>
    %173 = arith.truncf %104 : vector<8x16x8xf32> to vector<8x16x8xbf16>
    "tpu.trace_start"() <{level = 10 : i32, message = "nqk,nkd->nqd"}> : () -> ()
    %cst_43 = arith.constant dense<0.000000e+00> : vector<8x8x8xf32>
    %174 = tpu.matmul %172, %173, %cst_43 {dimension_numbers = #tpu.dot_dimension_numbers<[2], [1], [1], [2], [0, 0, 0, 1, 1, 2], [0], [0]>} : vector<8x8x16xbf16>, vector<8x16x8xbf16>, vector<8x8x8xf32> -> vector<8x8x8xf32>
    "tpu.trace_stop"() : () -> ()
    %175 = vector.extract_strided_slice %174 {offsets = [0, 0, 0], sizes = [1, 8, 8], strides = [1, 1, 1]} : vector<8x8x8xf32> to vector<1x8x8xf32>
    %176 = vector.shape_cast %175 : vector<1x8x8xf32> to vector<8x8xf32>
    %177 = vector.extract_strided_slice %174 {offsets = [1, 0, 0], sizes = [1, 8, 8], strides = [1, 1, 1]} : vector<8x8x8xf32> to vector<1x8x8xf32>
    %178 = vector.shape_cast %177 : vector<1x8x8xf32> to vector<8x8xf32>
    %179 = vector.extract_strided_slice %174 {offsets = [2, 0, 0], sizes = [1, 8, 8], strides = [1, 1, 1]} : vector<8x8x8xf32> to vector<1x8x8xf32>
    %180 = vector.shape_cast %179 : vector<1x8x8xf32> to vector<8x8xf32>
    %181 = vector.extract_strided_slice %174 {offsets = [3, 0, 0], sizes = [1, 8, 8], strides = [1, 1, 1]} : vector<8x8x8xf32> to vector<1x8x8xf32>
    %182 = vector.shape_cast %181 : vector<1x8x8xf32> to vector<8x8xf32>
    %183 = tpu.concatenate %176, %178, %180, %182 in 1 : vector<8x8xf32>, vector<8x8xf32>, vector<8x8xf32>, vector<8x8xf32> -> vector<8x32xf32>
    %184 = vector.extract_strided_slice %174 {offsets = [4, 0, 0], sizes = [1, 8, 8], strides = [1, 1, 1]} : vector<8x8x8xf32> to vector<1x8x8xf32>
    %185 = vector.shape_cast %184 : vector<1x8x8xf32> to vector<8x8xf32>
    %186 = vector.extract_strided_slice %174 {offsets = [5, 0, 0], sizes = [1, 8, 8], strides = [1, 1, 1]} : vector<8x8x8xf32> to vector<1x8x8xf32>
    %187 = vector.shape_cast %186 : vector<1x8x8xf32> to vector<8x8xf32>
    %188 = vector.extract_strided_slice %174 {offsets = [6, 0, 0], sizes = [1, 8, 8], strides = [1, 1, 1]} : vector<8x8x8xf32> to vector<1x8x8xf32>
    %189 = vector.shape_cast %188 : vector<1x8x8xf32> to vector<8x8xf32>
    %190 = vector.extract_strided_slice %174 {offsets = [7, 0, 0], sizes = [1, 8, 8], strides = [1, 1, 1]} : vector<8x8x8xf32> to vector<1x8x8xf32>
    %191 = vector.shape_cast %190 : vector<1x8x8xf32> to vector<8x8xf32>
    %192 = tpu.concatenate %185, %187, %189, %191 in 1 : vector<8x8xf32>, vector<8x8xf32>, vector<8x8xf32>, vector<8x8xf32> -> vector<8x32xf32>
    %193 = tpu.concatenate %183, %192 in 0 : vector<8x32xf32>, vector<8x32xf32> -> vector<16x32xf32>
    %194 = arith.truncf %193 : vector<16x32xf32> to vector<16x32xbf16>
    %c0_44 = arith.constant 0 : index
    %c0_45 = arith.constant 0 : index
    %195 = vector.load %arg4[%c0_44, %c0_45] : memref<32x32xbf16, #tpu.memory_space<vmem>>, vector<32x32xbf16>
    %cst_46 = arith.constant dense<0.000000e+00> : vector<16x32xf32>
    %196 = tpu.matmul %194, %195, %cst_46 {dimension_numbers = #tpu.dot_dimension_numbers<[1], [0], [0], [1], [0, 0, 1, 1], [], []>} : vector<16x32xbf16>, vector<32x32xbf16>, vector<16x32xf32> -> vector<16x32xf32>
    %197 = vector.broadcast %9 : vector<1x32xf32> to vector<16x32xf32>
    %198 = arith.addf %196, %197 : vector<16x32xf32>
    %199 = vector.broadcast %18 : vector<1x1xf32> to vector<16x32xf32>
    %200 = arith.mulf %199, %198 : vector<16x32xf32>
    %201 = arith.addf %20, %200 : vector<16x32xf32>
    %cst_47 = arith.constant dense<0.000000e+00> : vector<16xf32>
    %202 = vector.multi_reduction <add>, %201, %cst_47 [1] : vector<16x32xf32> to vector<16xf32>
    %203 = vector.shape_cast %202 : vector<16xf32> to vector<16x1xf32>
    %cst_48 = arith.constant 3.200000e+01 : f32
    %204 = vector.broadcast %cst_48 : f32 to vector<16x1xf32>
    %205 = arith.divf %203, %204 : vector<16x1xf32>
    %206 = vector.broadcast %205 : vector<16x1xf32> to vector<16x32xf32>
    %207 = arith.subf %201, %206 : vector<16x32xf32>
    %208 = arith.mulf %207, %207 : vector<16x32xf32>
    %cst_49 = arith.constant dense<0.000000e+00> : vector<16xf32>
    %209 = vector.multi_reduction <add>, %208, %cst_49 [1] : vector<16x32xf32> to vector<16xf32>
    %210 = vector.shape_cast %209 : vector<16xf32> to vector<16x1xf32>
    %cst_50 = arith.constant 3.200000e+01 : f32
    %211 = vector.broadcast %cst_50 : f32 to vector<16x1xf32>
    %212 = arith.divf %210, %211 : vector<16x1xf32>
    %213 = vector.broadcast %205 : vector<16x1xf32> to vector<16x32xf32>
    %214 = arith.subf %201, %213 : vector<16x32xf32>
    %cst_51 = arith.constant 9.99999997E-7 : f32
    %215 = vector.broadcast %cst_51 : f32 to vector<16x1xf32>
    %216 = arith.addf %212, %215 : vector<16x1xf32>
    %217 = math.rsqrt %216 : vector<16x1xf32>
    %218 = vector.broadcast %217 : vector<16x1xf32> to vector<16x32xf32>
    %219 = arith.mulf %214, %218 : vector<16x32xf32>
    %220 = vector.broadcast %2 : vector<1x32xf32> to vector<16x32xf32>
    %221 = arith.mulf %219, %220 : vector<16x32xf32>
    %222 = vector.broadcast %3 : vector<1x32xf32> to vector<16x32xf32>
    %223 = arith.addf %221, %222 : vector<16x32xf32>
    %224 = arith.truncf %223 : vector<16x32xf32> to vector<16x32xbf16>
    %c0_52 = arith.constant 0 : index
    %c0_53 = arith.constant 0 : index
    %225 = vector.load %arg5[%c0_52, %c0_53] : memref<32x64xbf16, #tpu.memory_space<vmem>>, vector<32x64xbf16>
    %cst_54 = arith.constant dense<0.000000e+00> : vector<16x64xf32>
    %226 = tpu.matmul %224, %225, %cst_54 {dimension_numbers = #tpu.dot_dimension_numbers<[1], [0], [0], [1], [0, 0, 1, 1], [], []>} : vector<16x32xbf16>, vector<32x64xbf16>, vector<16x64xf32> -> vector<16x64xf32>
    %227 = vector.broadcast %10 : vector<1x64xf32> to vector<16x64xf32>
    %228 = arith.addf %226, %227 : vector<16x64xf32>
    %cst_55 = arith.constant 5.000000e-01 : f32
    %229 = vector.broadcast %cst_55 : f32 to vector<16x64xf32>
    %230 = arith.mulf %229, %228 : vector<16x64xf32>
    %cst_56 = arith.constant 4.471500e-02 : f32
    %231 = vector.broadcast %cst_56 : f32 to vector<16x64xf32>
    %232 = arith.mulf %231, %228 : vector<16x64xf32>
    %233 = arith.mulf %232, %228 : vector<16x64xf32>
    %234 = arith.mulf %233, %228 : vector<16x64xf32>
    %235 = arith.addf %228, %234 : vector<16x64xf32>
    %cst_57 = arith.constant 0.797884583 : f32
    %236 = vector.broadcast %cst_57 : f32 to vector<16x64xf32>
    %237 = arith.mulf %236, %235 : vector<16x64xf32>
    %238 = math.tanh %237 : vector<16x64xf32>
    %cst_58 = arith.constant 1.000000e+00 : f32
    %239 = vector.broadcast %cst_58 : f32 to vector<16x64xf32>
    %240 = arith.addf %239, %238 : vector<16x64xf32>
    %241 = arith.mulf %230, %240 : vector<16x64xf32>
    %242 = arith.truncf %241 : vector<16x64xf32> to vector<16x64xbf16>
    %c0_59 = arith.constant 0 : index
    %c0_60 = arith.constant 0 : index
    %243 = vector.load %arg6[%c0_59, %c0_60] : memref<64x32xbf16, #tpu.memory_space<vmem>>, vector<64x32xbf16>
    %cst_61 = arith.constant dense<0.000000e+00> : vector<16x32xf32>
    %244 = tpu.matmul %242, %243, %cst_61 {dimension_numbers = #tpu.dot_dimension_numbers<[1], [0], [0], [1], [0, 0, 1, 1], [], []>} : vector<16x64xbf16>, vector<64x32xbf16>, vector<16x32xf32> -> vector<16x32xf32>
    %245 = vector.broadcast %11 : vector<1x32xf32> to vector<16x32xf32>
    %246 = arith.addf %244, %245 : vector<16x32xf32>
    %247 = vector.broadcast %19 : vector<1x1xf32> to vector<16x32xf32>
    %248 = arith.mulf %247, %246 : vector<16x32xf32>
    %249 = arith.addf %201, %248 : vector<16x32xf32>
    %c0_62 = arith.constant 0 : index
    %c0_63 = arith.constant 0 : index
    %250 = vector.load %arg8[%c0_62, %c0_63] : memref<16x32xf32, #tpu.memory_space<vmem>>, vector<16x32xf32>
    tpu.vector_store %arg8[%c0_62, %c0_63], %249 {strides = array<i32>} : memref<16x32xf32, #tpu.memory_space<vmem>>, vector<16x32xf32>,
    return
  }
}

</mosaic_0001>

<llo_original>
// kernel: cross_attention_layer.1
$region0: #{cross_attention_layer.1}
  #allocation0 [shape = 'u32[]', space=smem, size = 0x4, offset = 0x4, fixed_abs, tag = 'smem constant byte address 0x4 - core index']
  #allocation1 [shape = 'u32[144,128]{1,0:T(1,128)}', space=vmem, size = 0x12000, scoped, tag = 'internal scratch']
  %s0 = inlined_call_operand.vmem [shape: f32[16,32], index: 0, kind: input, shape index: {}]
  %s1 = inlined_call_operand.vmem [shape: f32[32,32], index: 1, kind: input, shape index: {}]
  %s2 = inlined_call_operand.hbm [shape: f32[2,1,8,16], index: 2, kind: input, shape index: {}]
  %s3 = inlined_call_operand.hbm [shape: bf16[32,96], index: 3, kind: input, shape index: {}]
  %s4 = inlined_call_operand.hbm [shape: bf16[32,32], index: 4, kind: input, shape index: {}]
  %s5 = inlined_call_operand.hbm [shape: bf16[32,64], index: 5, kind: input, shape index: {}]
  %s6 = inlined_call_operand.vmem [shape: bf16[64,32], index: 6, kind: input, shape index: {}]
  %s7 = inlined_call_operand.vmem [shape: f32[13,128], index: 7, kind: input, shape index: {}]
  %s8 = inlined_call_operand.hbm [shape: f32[16,32], index: 8, kind: output, shape index: {}]
  %s9 = sld [smem:[#allocation0]]
  $region58: #{cross_attention_layer.1} parent=0
    _
  %s11 = ssub.s32 1, %s9
  %s12 = scalar_select 0, %s11, %s9
  $region1: #{cross_attention_layer.1} parent=0
    #allocation2 [shape = 'u8[8192]{0}', space=vmem, size = 0x2000, scoped, tag = 'input window, operand 2, single buffered']
    #allocation3 [shape = 's32[1]{0}', space=sflag, size = 0x4, scoped, tag = 'scoped memory for cross_attention_layer.1']
    #allocation4 [shape = 's32[1]{0}', space=sflag, size = 0x4, scoped, tag = 'scoped memory for cross_attention_layer.1']
    #allocation5 [shape = 'u8[8192]{0}', space=vmem, size = 0x2000, scoped, tag = 'input window, operand 3, single buffered']
    #allocation6 [shape = 's32[1]{0}', space=sflag, size = 0x4, scoped, tag = 'scoped memory for cross_attention_layer.1']
    #allocation7 [shape = 'u8[8192]{0}', space=vmem, size = 0x2000, scoped, tag = 'input window, operand 4, single buffered']
    #allocation8 [shape = 'u8[8192]{0}', space=vmem, size = 0x2000, scoped, tag = 'input window, operand 5, single buffered']
    #allocation9 [shape = 's32[1]{0}', space=sflag, size = 0x4, scoped, tag = 'scoped memory for cross_attention_layer.1']
    #allocation10 [shape = 'u8[8192]{0}', space=vmem, size = 0x2000, scoped, tag = 'output window, operand 0, single buffered']
    %13 = vsyncpa [#allocation3], 0
    %14 = vsyncpa [#allocation6], 0
    %15 = vsyncpa [#allocation9], 0
    %16 = vsyncpa [#allocation4], 0
    // Predicated region
    $region2: #{cross_attention_layer.1} parent=1 // pred_check
      _
    $region3: #{cross_attention_layer.1} parent=1 // pred_check_branch
      %18 = sbr.rel (0) target = $region5
    $region4: #{cross_attention_layer.1} parent=1 // pred_region
      _
    $region5: #{cross_attention_layer.1} parent=1 // pred_fallthru
      _
    // Predicated region
    $region6: #{cross_attention_layer.1} parent=1 // pred_check
      _
    $region7: #{cross_attention_layer.1} parent=1 // pred_check_branch
      %20 = sbr.rel (0) target = $region9
    $region8: #{cross_attention_layer.1} parent=1 // pred_region
      _
    $region9: #{cross_attention_layer.1} parent=1 // pred_fallthru
      _
    // Predicated region
    $region10: #{cross_attention_layer.1} parent=1 // pred_check
      _
    $region11: #{cross_attention_layer.1} parent=1 // pred_check_branch
      %22 = sbr.rel (0) target = $region13
    $region12: #{cross_attention_layer.1} parent=1 // pred_region
      %s24 = ssub.s32 256, 256
      %25 = vsyncadd [#allocation3], %s24
      %s26 = sshll.u32 [#allocation2], 4
      %s27 = int_to_ptr.vmem [resolvable:$true] %s26
      %32 = dma.hbm_to_vmem [thread:$0]  %s2, 256, %s27, [#allocation3], 128, 128, 8
    $region13: #{cross_attention_layer.1} parent=1 // pred_fallthru
      _
    // Predicated region
    $region14: #{cross_attention_layer.1} parent=1 // pred_check
      _
    $region15: #{cross_attention_layer.1} parent=1 // pred_check_branch
      %34 = sbr.rel (0) target = $region17
    $region16: #{cross_attention_layer.1} parent=1 // pred_region
      %s36 = ssub.s32 256, 256
      %37 = vsyncadd [#allocation6], %s36
      %s38 = sshll.u32 [#allocation5], 4
      %s39 = int_to_ptr.vmem [resolvable:$true] %s38
      %44 = dma.hbm_to_vmem [thread:$0]  %s3, 256, %s39, [#allocation6], 64, 64, 4
    $region17: #{cross_attention_layer.1} parent=1 // pred_fallthru
      _
    // Predicated region
    $region18: #{cross_attention_layer.1} parent=1 // pred_check
      _
    $region19: #{cross_attention_layer.1} parent=1 // pred_check_branch
      %46 = sbr.rel (0) target = $region21
    $region20: #{cross_attention_layer.1} parent=1 // pred_region
      %s48 = ssub.s32 256, 256
      %49 = vsyncadd [#allocation6], %s48
      %s50 = sshll.u32 [#allocation7], 4
      %s51 = int_to_ptr.vmem [resolvable:$true] %s50
      %56 = dma.hbm_to_vmem [thread:$0]  %s4, 256, %s51, [#allocation6], 64, 64, 4
    $region21: #{cross_attention_layer.1} parent=1 // pred_fallthru
      _
    // Predicated region
    $region22: #{cross_attention_layer.1} parent=1 // pred_check
      _
    $region23: #{cross_attention_layer.1} parent=1 // pred_check_branch
      %58 = sbr.rel (0) target = $region25
    $region24: #{cross_attention_layer.1} parent=1 // pred_region
      %s60 = ssub.s32 256, 256
      %61 = vsyncadd [#allocation9], %s60
      %s62 = sshll.u32 [#allocation8], 4
      %s63 = int_to_ptr.vmem [resolvable:$true] %s62
      %68 = dma.hbm_to_vmem [thread:$0]  %s5, 256, %s63, [#allocation9], 64, 64, 4
    $region25: #{cross_attention_layer.1} parent=1 // pred_fallthru
      _
    // Predicated region
    $region26: #{cross_attention_layer.1} parent=1 // pred_check
      _
    $region27: #{cross_attention_layer.1} parent=1 // pred_check_branch
      %70 = sbr.rel (0) target = $region29
    $region28: #{cross_attention_layer.1} parent=1 // pred_region
      _
    $region29: #{cross_attention_layer.1} parent=1 // pred_fallthru
      _
    // Predicated region
    $region30: #{cross_attention_layer.1} parent=1 // pred_check
      _
    $region31: #{cross_attention_layer.1} parent=1 // pred_check_branch
      %72 = sbr.rel (0) target = $region33
    $region32: #{cross_attention_layer.1} parent=1 // pred_region
      _
    $region33: #{cross_attention_layer.1} parent=1 // pred_fallthru
      _
    // Predicated region
    $region34: #{cross_attention_layer.1} parent=1 // pred_check
      _
    $region35: #{cross_attention_layer.1} parent=1 // pred_check_branch
      %74 = sbr.rel (0) target = $region37
    $region36: #{cross_attention_layer.1} parent=1 // pred_region
      %75 = dma.done [#allocation3], 256
    $region37: #{cross_attention_layer.1} parent=1 // pred_fallthru
      _
    // Predicated region
    $region38: #{cross_attention_layer.1} parent=1 // pred_check
      _
    $region39: #{cross_attention_layer.1} parent=1 // pred_check_branch
      %77 = sbr.rel (0) target = $region41
    $region40: #{cross_attention_layer.1} parent=1 // pred_region
      %78 = dma.done [#allocation6], 256
    $region41: #{cross_attention_layer.1} parent=1 // pred_fallthru
      _
    // Predicated region
    $region42: #{cross_attention_layer.1} parent=1 // pred_check
      _
    $region43: #{cross_attention_layer.1} parent=1 // pred_check_branch
      %80 = sbr.rel (0) target = $region45
    $region44: #{cross_attention_layer.1} parent=1 // pred_region
      %81 = dma.done [#allocation6], 256
    $region45: #{cross_attention_layer.1} parent=1 // pred_fallthru
      _
    // Predicated region
    $region46: #{cross_attention_layer.1} parent=1 // pred_check
      _
    $region47: #{cross_attention_layer.1} parent=1 // pred_check_branch
      %83 = sbr.rel (0) target = $region49
    $region48: #{cross_attention_layer.1} parent=1 // pred_region
      %84 = dma.done [#allocation9], 256
    $region49: #{cross_attention_layer.1} parent=1 // pred_fallthru
      _
    %v86 = vld [vmem:[%s7] sm:$0x1]
    %v87 = vld [vmem:[%s7 + $0x1] sm:$0x1]
    %v88 = vld [vmem:[%s7 + $0x2] sm:$0x1]
    %v89 = vld [vmem:[%s7 + $0x3] sm:$0x1]
    %v90 = vld [vmem:[%s7 + $0x4] sm:$0x1]
    %v91 = vld [vmem:[%s7 + $0x5] sm:$0x1]
    %v92 = vld [vmem:[%s7 + $0x6] sm:$0x1]
    %v93 = vld [vmem:[%s7 + $0x7] sm:$0x1]
    %v94 = vld [vmem:[%s7 + $0x8] sm:$0x1]
    %v95 = vld [vmem:[%s7 + $0x9] sm:$0x1]
    %v96 = vld [vmem:[%s7 + $0xa] sm:$0x1]
    %v97 = vld [vmem:[%s7 + $0xb] sm:$0x1]
    %v98 = vld [vmem:[%s7 + $0xc] sm:$0x1]
    %v99 = vxor.u32 %v98, 2147483648
    %v100 = vmul.f32 %v99, 1.442695
    %v101 = vpow.pop %v100
    %v102 = vadd.f32 %v101, 1.0
    %v103 = vrcp.pop %v102
    %v104 = vmul.f32 1.0, %v103
    %v105 = vld [vmem:[%s0] sm:$0xff]
    %v106 = vld [vmem:[%s0 + $0x8] sm:$0xff]
    %vm107 = vcmask 261120
    %v108 = vsel %vm107, %v105, 0.0
    %109 = vadd.xlane.f32.xlu0 %v108
    %v110 = vpop.xlane.xlu0 %109
    %v111 = vsel %vm107, %v106, 0.0
    %112 = vadd.xlane.f32.xlu0 %v111
    %v113 = vpop.xlane.xlu0 %112
    %v114 = vrcp.pop 32.0
    %v115 = vmul.f32 %v110, %v114
    %v116 = vmul.f32 %v113, %v114
    %v117 = vsub.f32 %v105, %v115
    %v118 = vsub.f32 %v106, %v116
    %v119 = vmul.f32 %v117, %v117
    %v120 = vmul.f32 %v118, %v118
    %v121 = vsel %vm107, %v119, 0.0
    %122 = vadd.xlane.f32.xlu0 %v121
    %v123 = vpop.xlane.xlu0 %122
    %v124 = vsel %vm107, %v120, 0.0
    %125 = vadd.xlane.f32.xlu0 %v124
    %v126 = vpop.xlane.xlu0 %125
    %v127 = vmul.f32 %v123, %v114
    %v128 = vmul.f32 %v126, %v114
    %v129 = vadd.f32 %v127, 1e-06
    %v130 = vadd.f32 %v128, 1e-06
    %v131 = vrsqrt.pop %v129
    %v132 = vrsqrt.pop %v130
    %v133 = vmul.f32 %v117, %v131
    %v134 = vmul.f32 %v118, %v132
    %v135 = vlaneseq
    %v136 = vshrl.u32 %v135, 7
    %v137 = vsub.s32 0, %v136
    %v138 = vrot.slane %v86, %v137
    %v139 = vmul.f32 %v133, %v138
    %v140 = vmul.f32 %v134, %v138
    %v141 = vlaneseq
    %v142 = vshrl.u32 %v141, 7
    %v143 = vsub.s32 0, %v142
    %v144 = vrot.slane %v87, %v143
    %v145 = vadd.f32 %v139, %v144
    %v146 = vadd.f32 %v140, %v144
    %v147 = vpack.c.bf16 %v146, %v145
    %v148 = vld [vmem:[%s1] sm:$0xff]
    %v149 = vld [vmem:[%s1 + $0x8] sm:$0xff]
    %v150 = vld [vmem:[%s1 + $0x10] sm:$0xff]
    %v151 = vld [vmem:[%s1 + $0x18] sm:$0xff]
    %v152 = vpack.c.bf16 %v149, %v148
    %v153 = vpack.c.bf16 %v151, %v150
    %v154 = vld [vmem:[#allocation5] sm:$0xf]
    %v155 = vld [vmem:[#allocation5 + $0x4] sm:$0xf]
    %v156 = vld [vmem:[#allocation5 + $0x8] sm:$0xf]
    %v157 = vld [vmem:[#allocation5 + $0xc] sm:$0xf]
    %v158 = vlaneseq
    %v159 = vshrl.u32 %v158, 7
    %v160 = vsub.s32 0, %v159
    %v161 = vrot.slane %v94, %v160
    %v166 = vunpack.c.l.b16 %v154
    %v167 = vunpack.c.l.b16 %v155
    %v168 = vunpack.c.l.b16 %v156
    %v169 = vunpack.c.l.b16 %v157
    %v170 = vpack.c.b16 %v167, %v166
    %v171 = vpack.c.b16 %v169, %v168
    %v175 = vsel %vm107, %v147, 0
    %v178 = vsel %vm107, %v152, 0
    %v181 = vsel %vm107, %v153, 0
    %183 = vmatprep.subr.bf16.mxu0 0
    %184 = vmatpush1.bf16.msra.mxu0 0
    %185 = vmatprep.subr.bf16.mxu0 0
    %186 = vmatpush1.bf16.msra.mxu0 0
    %187 = vmatprep.subr.bf16.mxu0 0
    %188 = vmatpush1.bf16.msra.mxu0 0
    %189 = vmatprep.subr.bf16.mxu0 0
    %190 = vmatpush1.bf16.msra.mxu0 0
    %191 = vmatprep.subr.bf16.mxu0 0
    %192 = vmatpush1.bf16.msra.mxu0 0
    %193 = vmatprep.subr.bf16.mxu0 0
    %194 = vmatpush1.bf16.msra.mxu0 0
    %195 = vmatprep.subr.bf16.mxu0 0
    %196 = vmatpush1.bf16.msra.mxu0 %v171
    %197 = vmatprep.subr.bf16.mxu0 0
    %198 = vmatpush1.bf16.msra.mxu0 %v170
    %199 = vmatprep.subr.bf16.mxu0 0
    %200 = vmatpush2.bf16.msra.mxu0 0
    %201 = vmatprep.subr.bf16.mxu0 0
    %202 = vmatpush2.bf16.msra.mxu0 0
    %203 = vmatprep.subr.bf16.mxu0 0
    %204 = vmatpush2.bf16.msra.mxu0 0
    %205 = vmatprep.subr.bf16.mxu0 0
    %206 = vmatpush2.bf16.msra.mxu0 0
    %207 = vmatprep.subr.bf16.mxu0 0
    %208 = vmatpush2.bf16.msra.mxu0 0
    %209 = vmatprep.subr.bf16.mxu0 0
    %210 = vmatpush2.bf16.msra.mxu0 0
    %211 = vmatprep.subr.bf16.mxu0 0
    %212 = vmatpush2.bf16.msra.mxu0 0
    %213 = vmatprep.subr.bf16.mxu0 0
    %214 = vmatpush2.bf16.msra.mxu0 0
    %215 = vmatprep.mubr.bf16.mxu0 0
    %216 = vmatmul.mubr.bf16.gmra.mxu0 %v175
    %v217 = vpop.f32.mrf.mxu0
    %v218 = vadd.f32 %v161, %v217
    %v219 = vpop.f32.mrf.mxu0
    %v220 = vpop.f32.mrf.mxu0
    %v221 = vadd.f32 %v161, %v220
    %v222 = vpop.f32.mrf.mxu0
    %223 = vmatprep.mubr.bf16.mxu0 0
    %224 = vmatmul.mubr.bf16.gmra.mxu0 %v178
    %v225 = vpop.f32.mrf.mxu0
    %v226 = vadd.f32 %v161, %v225
    %v227 = vpop.f32.mrf.mxu0
    %v228 = vpop.f32.mrf.mxu0
    %v229 = vadd.f32 %v161, %v228
    %v230 = vpop.f32.mrf.mxu0
    %231 = vmatprep.mubr.bf16.mxu0 0
    %232 = vmatmul.mubr.bf16.gmra.mxu0 %v181
    %v233 = vpop.f32.mrf.mxu0
    %v234 = vadd.f32 %v161, %v233
    %v235 = vpop.f32.mrf.mxu0
    %v236 = vpop.f32.mrf.mxu0
    %v237 = vadd.f32 %v161, %v236
    %v238 = vpop.f32.mrf.mxu0
    %239 = vdwg.mxu0
    %241 = vrot.lane.b32.xlu0 %v218, 120
    %v242 = vpop.permute.xlu0 %241
    %244 = vrot.lane.b32.xlu0 %v218, 112
    %v245 = vpop.permute.xlu0 %244
    %247 = vrot.lane.b32.xlu0 %v218, 104
    %v248 = vpop.permute.xlu0 %247
    %251 = vrot.lane.b32.xlu0 %v221, 120
    %v252 = vpop.permute.xlu0 %251
    %254 = vrot.lane.b32.xlu0 %v221, 112
    %v255 = vpop.permute.xlu0 %254
    %257 = vrot.lane.b32.xlu0 %v221, 104
    %v258 = vpop.permute.xlu0 %257
    %262 = vrot.lane.b32.xlu0 %v226, 120
    %v263 = vpop.permute.xlu0 %262
    %264 = vrot.lane.b32.xlu0 %v229, 120
    %v265 = vpop.permute.xlu0 %264
    %268 = vrot.lane.b32.xlu0 %v226, 112
    %v269 = vpop.permute.xlu0 %268
    %270 = vrot.lane.b32.xlu0 %v229, 112
    %v271 = vpop.permute.xlu0 %270
    %274 = vrot.lane.b32.xlu0 %v226, 104
    %v275 = vpop.permute.xlu0 %274
    %276 = vrot.lane.b32.xlu0 %v229, 104
    %v277 = vpop.permute.xlu0 %276
    %282 = vrot.lane.b32.xlu0 %v234, 120
    %v283 = vpop.permute.xlu0 %282
    %284 = vrot.lane.b32.xlu0 %v237, 120
    %v285 = vpop.permute.xlu0 %284
    %288 = vrot.lane.b32.xlu0 %v234, 112
    %v289 = vpop.permute.xlu0 %288
    %290 = vrot.lane.b32.xlu0 %v237, 112
    %v291 = vpop.permute.xlu0 %290
    %294 = vrot.lane.b32.xlu0 %v234, 104
    %v295 = vpop.permute.xlu0 %294
    %296 = vrot.lane.b32.xlu0 %v237, 104
    %v297 = vpop.permute.xlu0 %296
    %vm300 = vcmask 64512
    %v301 = vsel %vm300, %v218, 0.0
    %302 = vadd.xlane.f32.xlu0 %v301
    %v303 = vpop.xlane.xlu0 %302
    %v304 = vsel %vm300, %v242, 0.0
    %305 = vadd.xlane.f32.xlu0 %v304
    %v306 = vpop.xlane.xlu0 %305
    %v307 = vsel %vm300, %v245, 0.0
    %308 = vadd.xlane.f32.xlu0 %v307
    %v309 = vpop.xlane.xlu0 %308
    %v310 = vsel %vm300, %v248, 0.0
    %311 = vadd.xlane.f32.xlu0 %v310
    %v312 = vpop.xlane.xlu0 %311
    %v313 = vsel %vm300, %v221, 0.0
    %314 = vadd.xlane.f32.xlu0 %v313
    %v315 = vpop.xlane.xlu0 %314
    %v316 = vsel %vm300, %v252, 0.0
    %317 = vadd.xlane.f32.xlu0 %v316
    %v318 = vpop.xlane.xlu0 %317
    %v319 = vsel %vm300, %v255, 0.0
    %320 = vadd.xlane.f32.xlu0 %v319
    %v321 = vpop.xlane.xlu0 %320
    %v322 = vsel %vm300, %v258, 0.0
    %323 = vadd.xlane.f32.xlu0 %v322
    %v324 = vpop.xlane.xlu0 %323
    %v325 = vrcp.pop 8.0
    %v326 = vmul.f32 %v303, %v325
    %v327 = vmul.f32 %v306, %v325
    %v328 = vmul.f32 %v309, %v325
    %v329 = vmul.f32 %v312, %v325
    %v330 = vmul.f32 %v315, %v325
    %v331 = vmul.f32 %v318, %v325
    %v332 = vmul.f32 %v321, %v325
    %v333 = vmul.f32 %v324, %v325
    %v334 = vsub.f32 %v218, %v326
    %v335 = vsub.f32 %v242, %v327
    %v336 = vsub.f32 %v245, %v328
    %v337 = vsub.f32 %v248, %v329
    %v338 = vsub.f32 %v221, %v330
    %v339 = vsub.f32 %v252, %v331
    %v340 = vsub.f32 %v255, %v332
    %v341 = vsub.f32 %v258, %v333
    %v342 = vmul.f32 %v334, %v334
    %v343 = vmul.f32 %v335, %v335
    %v344 = vmul.f32 %v336, %v336
    %v345 = vmul.f32 %v337, %v337
    %v346 = vmul.f32 %v338, %v338
    %v347 = vmul.f32 %v339, %v339
    %v348 = vmul.f32 %v340, %v340
    %v349 = vmul.f32 %v341, %v341
    %v350 = vsel %vm300, %v342, 0.0
    %351 = vadd.xlane.f32.xlu0 %v350
    %v352 = vpop.xlane.xlu0 %351
    %v353 = vsel %vm300, %v343, 0.0
    %354 = vadd.xlane.f32.xlu0 %v353
    %v355 = vpop.xlane.xlu0 %354
    %v356 = vsel %vm300, %v344, 0.0
    %357 = vadd.xlane.f32.xlu0 %v356
    %v358 = vpop.xlane.xlu0 %357
    %v359 = vsel %vm300, %v345, 0.0
    %360 = vadd.xlane.f32.xlu0 %v359
    %v361 = vpop.xlane.xlu0 %360
    %v362 = vsel %vm300, %v346, 0.0
    %363 = vadd.xlane.f32.xlu0 %v362
    %v364 = vpop.xlane.xlu0 %363
    %v365 = vsel %vm300, %v347, 0.0
    %366 = vadd.xlane.f32.xlu0 %v365
    %v367 = vpop.xlane.xlu0 %366
    %v368 = vsel %vm300, %v348, 0.0
    %369 = vadd.xlane.f32.xlu0 %v368
    %v370 = vpop.xlane.xlu0 %369
    %v371 = vsel %vm300, %v349, 0.0
    %372 = vadd.xlane.f32.xlu0 %v371
    %v373 = vpop.xlane.xlu0 %372
    %v374 = vmul.f32 %v352, %v325
    %v375 = vmul.f32 %v355, %v325
    %v376 = vmul.f32 %v358, %v325
    %v377 = vmul.f32 %v361, %v325
    %v378 = vmul.f32 %v364, %v325
    %v379 = vmul.f32 %v367, %v325
    %v380 = vmul.f32 %v370, %v325
    %v381 = vmul.f32 %v373, %v325
    %v382 = vadd.f32 %v374, 1e-06
    %v383 = vadd.f32 %v375, 1e-06
    %v384 = vadd.f32 %v376, 1e-06
    %v385 = vadd.f32 %v377, 1e-06
    %v386 = vadd.f32 %v378, 1e-06
    %v387 = vadd.f32 %v379, 1e-06
    %v388 = vadd.f32 %v380, 1e-06
    %v389 = vadd.f32 %v381, 1e-06
    %v390 = vrsqrt.pop %v382
    %v391 = vrsqrt.pop %v383
    %v392 = vrsqrt.pop %v384
    %v393 = vrsqrt.pop %v385
    %v394 = vrsqrt.pop %v386
    %v395 = vrsqrt.pop %v387
    %v396 = vrsqrt.pop %v388
    %v397 = vrsqrt.pop %v389
    %v398 = vmul.f32 %v334, %v390
    %v399 = vmul.f32 %v335, %v391
    %v400 = vmul.f32 %v336, %v392
    %v401 = vmul.f32 %v337, %v393
    %v402 = vmul.f32 %v338, %v394
    %v403 = vmul.f32 %v339, %v395
    %v404 = vmul.f32 %v340, %v396
    %v405 = vmul.f32 %v341, %v397
    %v406 = vlaneseq
    %v407 = vshrl.u32 %v406, 7
    %v408 = vsub.s32 0, %v407
    %v409 = vrot.slane %v90, %v408
    %v410 = vmul.f32 %v398, %v409
    %v411 = vmul.f32 %v399, %v409
    %v412 = vmul.f32 %v400, %v409
    %v413 = vmul.f32 %v401, %v409
    %v414 = vmul.f32 %v402, %v409
    %v415 = vmul.f32 %v403, %v409
    %v416 = vmul.f32 %v404, %v409
    %v417 = vmul.f32 %v405, %v409
    %v418 = vlaneseq
    %v419 = vshrl.u32 %v418, 7
    %v420 = vsub.s32 0, %v419
    %v421 = vrot.slane %v91, %v420
    %v422 = vadd.f32 %v410, %v421
    %v423 = vadd.f32 %v411, %v421
    %v424 = vadd.f32 %v412, %v421
    %v425 = vadd.f32 %v413, %v421
    %v426 = vadd.f32 %v414, %v421
    %v427 = vadd.f32 %v415, %v421
    %v428 = vadd.f32 %v416, %v421
    %v429 = vadd.f32 %v417, %v421
    %430 = vrot.lane.b32.xlu0 %v226, 96
    %v431 = vpop.permute.xlu0 %430
    %432 = vrot.lane.b32.xlu0 %v229, 96
    %v433 = vpop.permute.xlu0 %432
    %434 = vrot.lane.b32.xlu0 %v263, 96
    %v435 = vpop.permute.xlu0 %434
    %436 = vrot.lane.b32.xlu0 %v265, 96
    %v437 = vpop.permute.xlu0 %436
    %438 = vrot.lane.b32.xlu0 %v269, 96
    %v439 = vpop.permute.xlu0 %438
    %440 = vrot.lane.b32.xlu0 %v271, 96
    %v441 = vpop.permute.xlu0 %440
    %442 = vrot.lane.b32.xlu0 %v275, 96
    %v443 = vpop.permute.xlu0 %442
    %444 = vrot.lane.b32.xlu0 %v277, 96
    %v445 = vpop.permute.xlu0 %444
    %446 = vrot.lane.b32.xlu0 %v234, 96
    %v447 = vpop.permute.xlu0 %446
    %448 = vrot.lane.b32.xlu0 %v237, 96
    %v449 = vpop.permute.xlu0 %448
    %450 = vrot.lane.b32.xlu0 %v283, 96
    %v451 = vpop.permute.xlu0 %450
    %452 = vrot.lane.b32.xlu0 %v285, 96
    %v453 = vpop.permute.xlu0 %452
    %454 = vrot.lane.b32.xlu0 %v289, 96
    %v455 = vpop.permute.xlu0 %454
    %456 = vrot.lane.b32.xlu0 %v291, 96
    %v457 = vpop.permute.xlu0 %456
    %458 = vrot.lane.b32.xlu0 %v295, 96
    %v459 = vpop.permute.xlu0 %458
    %460 = vrot.lane.b32.xlu0 %v297, 96
    %v461 = vpop.permute.xlu0 %460
    %v478 = vsel %vm300, %v431, 0.0
    %479 = vadd.xlane.f32.xlu0 %v478
    %v480 = vpop.xlane.xlu0 %479
    %v481 = vsel %vm300, %v433, 0.0
    %482 = vadd.xlane.f32.xlu0 %v481
    %v483 = vpop.xlane.xlu0 %482
    %v484 = vsel %vm300, %v435, 0.0
    %485 = vadd.xlane.f32.xlu0 %v484
    %v486 = vpop.xlane.xlu0 %485
    %v487 = vsel %vm300, %v437, 0.0
    %488 = vadd.xlane.f32.xlu0 %v487
    %v489 = vpop.xlane.xlu0 %488
    %v490 = vsel %vm300, %v439, 0.0
    %491 = vadd.xlane.f32.xlu0 %v490
    %v492 = vpop.xlane.xlu0 %491
    %v493 = vsel %vm300, %v441, 0.0
    %494 = vadd.xlane.f32.xlu0 %v493
    %v495 = vpop.xlane.xlu0 %494
    %v496 = vsel %vm300, %v443, 0.0
    %497 = vadd.xlane.f32.xlu0 %v496
    %v498 = vpop.xlane.xlu0 %497
    %v499 = vsel %vm300, %v445, 0.0
    %500 = vadd.xlane.f32.xlu0 %v499
    %v501 = vpop.xlane.xlu0 %500
    %v502 = vsel %vm300, %v447, 0.0
    %503 = vadd.xlane.f32.xlu0 %v502
    %v504 = vpop.xlane.xlu0 %503
    %v505 = vsel %vm300, %v449, 0.0
    %506 = vadd.xlane.f32.xlu0 %v505
    %v507 = vpop.xlane.xlu0 %506
    %v508 = vsel %vm300, %v451, 0.0
    %509 = vadd.xlane.f32.xlu0 %v508
    %v510 = vpop.xlane.xlu0 %509
    %v511 = vsel %vm300, %v453, 0.0
    %512 = vadd.xlane.f32.xlu0 %v511
    %v513 = vpop.xlane.xlu0 %512
    %v514 = vsel %vm300, %v455, 0.0
    %515 = vadd.xlane.f32.xlu0 %v514
    %v516 = vpop.xlane.xlu0 %515
    %v517 = vsel %vm300, %v457, 0.0
    %518 = vadd.xlane.f32.xlu0 %v517
    %v519 = vpop.xlane.xlu0 %518
    %v520 = vsel %vm300, %v459, 0.0
    %521 = vadd.xlane.f32.xlu0 %v520
    %v522 = vpop.xlane.xlu0 %521
    %v523 = vsel %vm300, %v461, 0.0
    %524 = vadd.xlane.f32.xlu0 %v523
    %v525 = vpop.xlane.xlu0 %524
    %v526 = vmul.f32 %v480, %v325
    %v527 = vmul.f32 %v483, %v325
    %v528 = vmul.f32 %v486, %v325
    %v529 = vmul.f32 %v489, %v325
    %v530 = vmul.f32 %v492, %v325
    %v531 = vmul.f32 %v495, %v325
    %v532 = vmul.f32 %v498, %v325
    %v533 = vmul.f32 %v501, %v325
    %v534 = vmul.f32 %v504, %v325
    %v535 = vmul.f32 %v507, %v325
    %v536 = vmul.f32 %v510, %v325
    %v537 = vmul.f32 %v513, %v325
    %v538 = vmul.f32 %v516, %v325
    %v539 = vmul.f32 %v519, %v325
    %v540 = vmul.f32 %v522, %v325
    %v541 = vmul.f32 %v525, %v325
    %v542 = vsub.f32 %v226, %v526
    %v543 = vsub.f32 %v229, %v527
    %v544 = vsub.f32 %v263, %v528
    %v545 = vsub.f32 %v265, %v529
    %v546 = vsub.f32 %v269, %v530
    %v547 = vsub.f32 %v271, %v531
    %v548 = vsub.f32 %v275, %v532
    %v549 = vsub.f32 %v277, %v533
    %v550 = vsub.f32 %v234, %v534
    %v551 = vsub.f32 %v237, %v535
    %v552 = vsub.f32 %v283, %v536
    %v553 = vsub.f32 %v285, %v537
    %v554 = vsub.f32 %v289, %v538
    %v555 = vsub.f32 %v291, %v539
    %v556 = vsub.f32 %v295, %v540
    %v557 = vsub.f32 %v297, %v541
    %v558 = vmul.f32 %v542, %v542
    %v559 = vmul.f32 %v543, %v543
    %v560 = vmul.f32 %v544, %v544
    %v561 = vmul.f32 %v545, %v545
    %v562 = vmul.f32 %v546, %v546
    %v563 = vmul.f32 %v547, %v547
    %v564 = vmul.f32 %v548, %v548
    %v565 = vmul.f32 %v549, %v549
    %v566 = vmul.f32 %v550, %v550
    %v567 = vmul.f32 %v551, %v551
    %v568 = vmul.f32 %v552, %v552
    %v569 = vmul.f32 %v553, %v553
    %v570 = vmul.f32 %v554, %v554
    %v571 = vmul.f32 %v555, %v555
    %v572 = vmul.f32 %v556, %v556
    %v573 = vmul.f32 %v557, %v557
    %590 = vrot.lane.b32.xlu0 %v558, 96
    %v591 = vpop.permute.xlu0 %590
    %592 = vrot.lane.b32.xlu0 %v559, 96
    %v593 = vpop.permute.xlu0 %592
    %594 = vrot.lane.b32.xlu0 %v560, 96
    %v595 = vpop.permute.xlu0 %594
    %596 = vrot.lane.b32.xlu0 %v561, 96
    %v597 = vpop.permute.xlu0 %596
    %598 = vrot.lane.b32.xlu0 %v562, 96
    %v599 = vpop.permute.xlu0 %598
    %600 = vrot.lane.b32.xlu0 %v563, 96
    %v601 = vpop.permute.xlu0 %600
    %602 = vrot.lane.b32.xlu0 %v564, 96
    %v603 = vpop.permute.xlu0 %602
    %604 = vrot.lane.b32.xlu0 %v565, 96
    %v605 = vpop.permute.xlu0 %604
    %606 = vrot.lane.b32.xlu0 %v566, 96
    %v607 = vpop.permute.xlu0 %606
    %608 = vrot.lane.b32.xlu0 %v567, 96
    %v609 = vpop.permute.xlu0 %608
    %610 = vrot.lane.b32.xlu0 %v568, 96
    %v611 = vpop.permute.xlu0 %610
    %612 = vrot.lane.b32.xlu0 %v569, 96
    %v613 = vpop.permute.xlu0 %612
    %614 = vrot.lane.b32.xlu0 %v570, 96
    %v615 = vpop.permute.xlu0 %614
    %616 = vrot.lane.b32.xlu0 %v571, 96
    %v617 = vpop.permute.xlu0 %616
    %618 = vrot.lane.b32.xlu0 %v572, 96
    %v619 = vpop.permute.xlu0 %618
    %620 = vrot.lane.b32.xlu0 %v573, 96
    %v621 = vpop.permute.xlu0 %620
    %v638 = vsel %vm300, %v591, 0.0
    %639 = vadd.xlane.f32.xlu0 %v638
    %v640 = vpop.xlane.xlu0 %639
    %v641 = vsel %vm300, %v593, 0.0
    %642 = vadd.xlane.f32.xlu0 %v641
    %v643 = vpop.xlane.xlu0 %642
    %v644 = vsel %vm300, %v595, 0.0
    %645 = vadd.xlane.f32.xlu0 %v644
    %v646 = vpop.xlane.xlu0 %645
    %v647 = vsel %vm300, %v597, 0.0
    %648 = vadd.xlane.f32.xlu0 %v647
    %v649 = vpop.xlane.xlu0 %648
    %v650 = vsel %vm300, %v599, 0.0
    %651 = vadd.xlane.f32.xlu0 %v650
    %v652 = vpop.xlane.xlu0 %651
    %v653 = vsel %vm300, %v601, 0.0
    %654 = vadd.xlane.f32.xlu0 %v653
    %v655 = vpop.xlane.xlu0 %654
    %v656 = vsel %vm300, %v603, 0.0
    %657 = vadd.xlane.f32.xlu0 %v656
    %v658 = vpop.xlane.xlu0 %657
    %v659 = vsel %vm300, %v605, 0.0
    %660 = vadd.xlane.f32.xlu0 %v659
    %v661 = vpop.xlane.xlu0 %660
    %v662 = vsel %vm300, %v607, 0.0
    %663 = vadd.xlane.f32.xlu0 %v662
    %v664 = vpop.xlane.xlu0 %663
    %v665 = vsel %vm300, %v609, 0.0
    %666 = vadd.xlane.f32.xlu0 %v665
    %v667 = vpop.xlane.xlu0 %666
    %v668 = vsel %vm300, %v611, 0.0
    %669 = vadd.xlane.f32.xlu0 %v668
    %v670 = vpop.xlane.xlu0 %669
    %v671 = vsel %vm300, %v613, 0.0
    %672 = vadd.xlane.f32.xlu0 %v671
    %v673 = vpop.xlane.xlu0 %672
    %v674 = vsel %vm300, %v615, 0.0
    %675 = vadd.xlane.f32.xlu0 %v674
    %v676 = vpop.xlane.xlu0 %675
    %v677 = vsel %vm300, %v617, 0.0
    %678 = vadd.xlane.f32.xlu0 %v677
    %v679 = vpop.xlane.xlu0 %678
    %v680 = vsel %vm300, %v619, 0.0
    %681 = vadd.xlane.f32.xlu0 %v680
    %v682 = vpop.xlane.xlu0 %681
    %v683 = vsel %vm300, %v621, 0.0
    %684 = vadd.xlane.f32.xlu0 %v683
    %v685 = vpop.xlane.xlu0 %684
    %v686 = vmul.f32 %v640, %v325
    %v687 = vmul.f32 %v643, %v325
    %v688 = vmul.f32 %v646, %v325
    %v689 = vmul.f32 %v649, %v325
    %v690 = vmul.f32 %v652, %v325
    %v691 = vmul.f32 %v655, %v325
    %v692 = vmul.f32 %v658, %v325
    %v693 = vmul.f32 %v661, %v325
    %v694 = vmul.f32 %v664, %v325
    %v695 = vmul.f32 %v667, %v325
    %v696 = vmul.f32 %v670, %v325
    %v697 = vmul.f32 %v673, %v325
    %v698 = vmul.f32 %v676, %v325
    %v699 = vmul.f32 %v679, %v325
    %v700 = vmul.f32 %v682, %v325
    %v701 = vmul.f32 %v685, %v325
    %v702 = vadd.f32 %v686, 1e-06
    %v703 = vadd.f32 %v687, 1e-06
    %v704 = vadd.f32 %v688, 1e-06
    %v705 = vadd.f32 %v689, 1e-06
    %v706 = vadd.f32 %v690, 1e-06
    %v707 = vadd.f32 %v691, 1e-06
    %v708 = vadd.f32 %v692, 1e-06
    %v709 = vadd.f32 %v693, 1e-06
    %v710 = vadd.f32 %v694, 1e-06
    %v711 = vadd.f32 %v695, 1e-06
    %v712 = vadd.f32 %v696, 1e-06
    %v713 = vadd.f32 %v697, 1e-06
    %v714 = vadd.f32 %v698, 1e-06
    %v715 = vadd.f32 %v699, 1e-06
    %v716 = vadd.f32 %v700, 1e-06
    %v717 = vadd.f32 %v701, 1e-06
    %v718 = vrsqrt.pop %v702
    %v719 = vrsqrt.pop %v703
    %v720 = vrsqrt.pop %v704
    %v721 = vrsqrt.pop %v705
    %v722 = vrsqrt.pop %v706
    %v723 = vrsqrt.pop %v707
    %v724 = vrsqrt.pop %v708
    %v725 = vrsqrt.pop %v709
    %v726 = vrsqrt.pop %v710
    %v727 = vrsqrt.pop %v711
    %v728 = vrsqrt.pop %v712
    %v729 = vrsqrt.pop %v713
    %v730 = vrsqrt.pop %v714
    %v731 = vrsqrt.pop %v715
    %v732 = vrsqrt.pop %v716
    %v733 = vrsqrt.pop %v717
    %v734 = vmul.f32 %v542, %v718
    %v735 = vmul.f32 %v543, %v719
    %v736 = vmul.f32 %v544, %v720
    %v737 = vmul.f32 %v545, %v721
    %v738 = vmul.f32 %v546, %v722
    %v739 = vmul.f32 %v547, %v723
    %v740 = vmul.f32 %v548, %v724
    %v741 = vmul.f32 %v549, %v725
    %v742 = vmul.f32 %v550, %v726
    %v743 = vmul.f32 %v551, %v727
    %v744 = vmul.f32 %v552, %v728
    %v745 = vmul.f32 %v553, %v729
    %v746 = vmul.f32 %v554, %v730
    %v747 = vmul.f32 %v555, %v731
    %v748 = vmul.f32 %v556, %v732
    %v749 = vmul.f32 %v557, %v733
    %v750 = vlaneseq
    %v751 = vshrl.u32 %v750, 7
    %v752 = vsub.s32 0, %v751
    %v753 = vrot.slane %v92, %v752
    %755 = vrot.lane.b32.xlu0 %v753, 32
    %v756 = vpop.permute.xlu0 %755
    %v758 = vmul.f32 %v734, %v756
    %v759 = vmul.f32 %v735, %v756
    %v760 = vmul.f32 %v736, %v756
    %v761 = vmul.f32 %v737, %v756
    %v762 = vmul.f32 %v738, %v756
    %v763 = vmul.f32 %v739, %v756
    %v764 = vmul.f32 %v740, %v756
    %v765 = vmul.f32 %v741, %v756
    %v766 = vmul.f32 %v742, %v756
    %v767 = vmul.f32 %v743, %v756
    %v768 = vmul.f32 %v744, %v756
    %v769 = vmul.f32 %v745, %v756
    %v770 = vmul.f32 %v746, %v756
    %v771 = vmul.f32 %v747, %v756
    %v772 = vmul.f32 %v748, %v756
    %v773 = vmul.f32 %v749, %v756
    %v774 = vlaneseq
    %v775 = vshrl.u32 %v774, 7
    %v776 = vsub.s32 0, %v775
    %v777 = vrot.slane %v93, %v776
    %779 = vrot.lane.b32.xlu0 %v777, 32
    %v780 = vpop.permute.xlu0 %779
    %v782 = vadd.f32 %v758, %v780
    %v783 = vadd.f32 %v759, %v780
    %v784 = vadd.f32 %v760, %v780
    %v785 = vadd.f32 %v761, %v780
    %v786 = vadd.f32 %v762, %v780
    %v787 = vadd.f32 %v763, %v780
    %v788 = vadd.f32 %v764, %v780
    %v789 = vadd.f32 %v765, %v780
    %v790 = vadd.f32 %v766, %v780
    %v791 = vadd.f32 %v767, %v780
    %v792 = vadd.f32 %v768, %v780
    %v793 = vadd.f32 %v769, %v780
    %v794 = vadd.f32 %v770, %v780
    %v795 = vadd.f32 %v771, %v780
    %v796 = vadd.f32 %v772, %v780
    %v797 = vadd.f32 %v773, %v780
    %v798 = vpack.c.bf16 %v422, %v422
    %v799 = vpack.c.bf16 %v423, %v423
    %v800 = vpack.c.bf16 %v424, %v424
    %v801 = vpack.c.bf16 %v425, %v425
    %v802 = vpack.c.bf16 %v426, %v426
    %v803 = vpack.c.bf16 %v427, %v427
    %v804 = vpack.c.bf16 %v428, %v428
    %v805 = vpack.c.bf16 %v429, %v429
    %v806 = vpack.c.bf16 %v783, %v782
    %v807 = vpack.c.bf16 %v785, %v784
    %v808 = vpack.c.bf16 %v787, %v786
    %v809 = vpack.c.bf16 %v789, %v788
    %v810 = vpack.c.bf16 %v791, %v790
    %v811 = vpack.c.bf16 %v793, %v792
    %v812 = vpack.c.bf16 %v795, %v794
    %v813 = vpack.c.bf16 %v797, %v796
    %815 = vrot.lane.b32.xlu0 %v806, 96
    %v816 = vpop.permute.xlu0 %815
    %v818 = vsel %vm300, %v798, 0
    %v821 = vsel %vm300, %v816, 0
    %823 = vmatprep.subr.bf16.mxu0 0
    %824 = vmatpush1.bf16.xpose.msra.mxu0 0
    %825 = vmatprep.subr.bf16.mxu0 0
    %826 = vmatpush1.bf16.xpose.msra.mxu0 0
    %827 = vmatprep.subr.bf16.mxu0 0
    %828 = vmatpush1.bf16.xpose.msra.mxu0 0
    %829 = vmatprep.subr.bf16.mxu0 0
    %830 = vmatpush1.bf16.xpose.msra.mxu0 0
    %831 = vmatprep.subr.bf16.mxu0 0
    %832 = vmatpush1.bf16.xpose.msra.mxu0 0
    %833 = vmatprep.subr.bf16.mxu0 0
    %834 = vmatpush1.bf16.xpose.msra.mxu0 0
    %835 = vmatprep.subr.bf16.mxu0 0
    %836 = vmatpush1.bf16.xpose.msra.mxu0 0
    %837 = vmatprep.subr.bf16.mxu0 0
    %838 = vmatpush1.bf16.xpose.msra.mxu0 %v821
    %839 = vmatprep.subr.bf16.mxu0 0
    %840 = vmatpush2.bf16.xpose.msra.mxu0 0
    %841 = vmatprep.subr.bf16.mxu0 0
    %842 = vmatpush2.bf16.xpose.msra.mxu0 0
    %843 = vmatprep.subr.bf16.mxu0 0
    %844 = vmatpush2.bf16.xpose.msra.mxu0 0
    %845 = vmatprep.subr.bf16.mxu0 0
    %846 = vmatpush2.bf16.xpose.msra.mxu0 0
    %847 = vmatprep.subr.bf16.mxu0 0
    %848 = vmatpush2.bf16.xpose.msra.mxu0 0
    %849 = vmatprep.subr.bf16.mxu0 0
    %850 = vmatpush2.bf16.xpose.msra.mxu0 0
    %851 = vmatprep.subr.bf16.mxu0 0
    %852 = vmatpush2.bf16.xpose.msra.mxu0 0
    %853 = vmatprep.subr.bf16.mxu0 0
    %854 = vmatpush2.bf16.xpose.msra.mxu0 0
    %855 = vmatprep.mubr.bf16.mxu0 0
    %856 = vmatmul.mubr.bf16.gmra.mxu0 %v818
    %v857 = vpop.f32.mrf.mxu0
    %v858 = vadd.f32 0.0, %v857
    %v859 = vpop.f32.mrf.mxu0
    %v860 = vpop.f32.mrf.mxu0
    %v861 = vpop.f32.mrf.mxu0
    %862 = vdwg.mxu0
    %864 = vrot.lane.b32.xlu0 %v807, 96
    %v865 = vpop.permute.xlu0 %864
    %v867 = vsel %vm300, %v799, 0
    %v870 = vsel %vm300, %v865, 0
    %872 = vmatprep.subr.bf16.mxu0 0
    %873 = vmatpush1.bf16.xpose.msra.mxu0 0
    %874 = vmatprep.subr.bf16.mxu0 0
    %875 = vmatpush1.bf16.xpose.msra.mxu0 0
    %876 = vmatprep.subr.bf16.mxu0 0
    %877 = vmatpush1.bf16.xpose.msra.mxu0 0
    %878 = vmatprep.subr.bf16.mxu0 0
    %879 = vmatpush1.bf16.xpose.msra.mxu0 0
    %880 = vmatprep.subr.bf16.mxu0 0
    %881 = vmatpush1.bf16.xpose.msra.mxu0 0
    %882 = vmatprep.subr.bf16.mxu0 0
    %883 = vmatpush1.bf16.xpose.msra.mxu0 0
    %884 = vmatprep.subr.bf16.mxu0 0
    %885 = vmatpush1.bf16.xpose.msra.mxu0 0
    %886 = vmatprep.subr.bf16.mxu0 0
    %887 = vmatpush1.bf16.xpose.msra.mxu0 %v870
    %888 = vmatprep.subr.bf16.mxu0 0
    %889 = vmatpush2.bf16.xpose.msra.mxu0 0
    %890 = vmatprep.subr.bf16.mxu0 0
    %891 = vmatpush2.bf16.xpose.msra.mxu0 0
    %892 = vmatprep.subr.bf16.mxu0 0
    %893 = vmatpush2.bf16.xpose.msra.mxu0 0
    %894 = vmatprep.subr.bf16.mxu0 0
    %895 = vmatpush2.bf16.xpose.msra.mxu0 0
    %896 = vmatprep.subr.bf16.mxu0 0
    %897 = vmatpush2.bf16.xpose.msra.mxu0 0
    %898 = vmatprep.subr.bf16.mxu0 0
    %899 = vmatpush2.bf16.xpose.msra.mxu0 0
    %900 = vmatprep.subr.bf16.mxu0 0
    %901 = vmatpush2.bf16.xpose.msra.mxu0 0
    %902 = vmatprep.subr.bf16.mxu0 0
    %903 = vmatpush2.bf16.xpose.msra.mxu0 0
    %904 = vmatprep.mubr.bf16.mxu0 0
    %905 = vmatmul.mubr.bf16.gmra.mxu0 %v867
    %v906 = vpop.f32.mrf.mxu0
    %v907 = vadd.f32 0.0, %v906
    %v908 = vpop.f32.mrf.mxu0
    %v909 = vpop.f32.mrf.mxu0
    %v910 = vpop.f32.mrf.mxu0
    %911 = vdwg.mxu0
    %913 = vrot.lane.b32.xlu0 %v808, 96
    %v914 = vpop.permute.xlu0 %913
    %v916 = vsel %vm300, %v800, 0
    %v919 = vsel %vm300, %v914, 0
    %921 = vmatprep.subr.bf16.mxu0 0
    %922 = vmatpush1.bf16.xpose.msra.mxu0 0
    %923 = vmatprep.subr.bf16.mxu0 0
    %924 = vmatpush1.bf16.xpose.msra.mxu0 0
    %925 = vmatprep.subr.bf16.mxu0 0
    %926 = vmatpush1.bf16.xpose.msra.mxu0 0
    %927 = vmatprep.subr.bf16.mxu0 0
    %928 = vmatpush1.bf16.xpose.msra.mxu0 0
    %929 = vmatprep.subr.bf16.mxu0 0
    %930 = vmatpush1.bf16.xpose.msra.mxu0 0
    %931 = vmatprep.subr.bf16.mxu0 0
    %932 = vmatpush1.bf16.xpose.msra.mxu0 0
    %933 = vmatprep.subr.bf16.mxu0 0
    %934 = vmatpush1.bf16.xpose.msra.mxu0 0
    %935 = vmatprep.subr.bf16.mxu0 0
    %936 = vmatpush1.bf16.xpose.msra.mxu0 %v919
    %937 = vmatprep.subr.bf16.mxu0 0
    %938 = vmatpush2.bf16.xpose.msra.mxu0 0
    %939 = vmatprep.subr.bf16.mxu0 0
    %940 = vmatpush2.bf16.xpose.msra.mxu0 0
    %941 = vmatprep.subr.bf16.mxu0 0
    %942 = vmatpush2.bf16.xpose.msra.mxu0 0
    %943 = vmatprep.subr.bf16.mxu0 0
    %944 = vmatpush2.bf16.xpose.msra.mxu0 0
    %945 = vmatprep.subr.bf16.mxu0 0
    %946 = vmatpush2.bf16.xpose.msra.mxu0 0
    %947 = vmatprep.subr.bf16.mxu0 0
    %948 = vmatpush2.bf16.xpose.msra.mxu0 0
    %949 = vmatprep.subr.bf16.mxu0 0
    %950 = vmatpush2.bf16.xpose.msra.mxu0 0
    %951 = vmatprep.subr.bf16.mxu0 0
    %952 = vmatpush2.bf16.xpose.msra.mxu0 0
    %953 = vmatprep.mubr.bf16.mxu0 0
    %954 = vmatmul.mubr.bf16.gmra.mxu0 %v916
    %v955 = vpop.f32.mrf.mxu0
    %v956 = vadd.f32 0.0, %v955
    %v957 = vpop.f32.mrf.mxu0
    %v958 = vpop.f32.mrf.mxu0
    %v959 = vpop.f32.mrf.mxu0
    %960 = vdwg.mxu0
    %962 = vrot.lane.b32.xlu0 %v809, 96
    %v963 = vpop.permute.xlu0 %962
    %v965 = vsel %vm300, %v801, 0
    %v968 = vsel %vm300, %v963, 0
    %970 = vmatprep.subr.bf16.mxu0 0
    %971 = vmatpush1.bf16.xpose.msra.mxu0 0
    %972 = vmatprep.subr.bf16.mxu0 0
    %973 = vmatpush1.bf16.xpose.msra.mxu0 0
    %974 = vmatprep.subr.bf16.mxu0 0
    %975 = vmatpush1.bf16.xpose.msra.mxu0 0
    %976 = vmatprep.subr.bf16.mxu0 0
    %977 = vmatpush1.bf16.xpose.msra.mxu0 0
    %978 = vmatprep.subr.bf16.mxu0 0
    %979 = vmatpush1.bf16.xpose.msra.mxu0 0
    %980 = vmatprep.subr.bf16.mxu0 0
    %981 = vmatpush1.bf16.xpose.msra.mxu0 0
    %982 = vmatprep.subr.bf16.mxu0 0
    %983 = vmatpush1.bf16.xpose.msra.mxu0 0
    %984 = vmatprep.subr.bf16.mxu0 0
    %985 = vmatpush1.bf16.xpose.msra.mxu0 %v968
    %986 = vmatprep.subr.bf16.mxu0 0
    %987 = vmatpush2.bf16.xpose.msra.mxu0 0
    %988 = vmatprep.subr.bf16.mxu0 0
    %989 = vmatpush2.bf16.xpose.msra.mxu0 0
    %990 = vmatprep.subr.bf16.mxu0 0
    %991 = vmatpush2.bf16.xpose.msra.mxu0 0
    %992 = vmatprep.subr.bf16.mxu0 0
    %993 = vmatpush2.bf16.xpose.msra.mxu0 0
    %994 = vmatprep.subr.bf16.mxu0 0
    %995 = vmatpush2.bf16.xpose.msra.mxu0 0
    %996 = vmatprep.subr.bf16.mxu0 0
    %997 = vmatpush2.bf16.xpose.msra.mxu0 0
    %998 = vmatprep.subr.bf16.mxu0 0
    %999 = vmatpush2.bf16.xpose.msra.mxu0 0
    %1000 = vmatprep.subr.bf16.mxu0 0
    %1001 = vmatpush2.bf16.xpose.msra.mxu0 0
    %1002 = vmatprep.mubr.bf16.mxu0 0
    %1003 = vmatmul.mubr.bf16.gmra.mxu0 %v965
    %v1004 = vpop.f32.mrf.mxu0
    %v1005 = vadd.f32 0.0, %v1004
    %v1006 = vpop.f32.mrf.mxu0
    %v1007 = vpop.f32.mrf.mxu0
    %v1008 = vpop.f32.mrf.mxu0
    %1009 = vdwg.mxu0
    %1011 = vrot.lane.b32.xlu0 %v810, 96
    %v1012 = vpop.permute.xlu0 %1011
    %v1014 = vsel %vm300, %v802, 0
    %v1017 = vsel %vm300, %v1012, 0
    %1019 = vmatprep.subr.bf16.mxu0 0
    %1020 = vmatpush1.bf16.xpose.msra.mxu0 0
    %1021 = vmatprep.subr.bf16.mxu0 0
    %1022 = vmatpush1.bf16.xpose.msra.mxu0 0
    %1023 = vmatprep.subr.bf16.mxu0 0
    %1024 = vmatpush1.bf16.xpose.msra.mxu0 0
    %1025 = vmatprep.subr.bf16.mxu0 0
    %1026 = vmatpush1.bf16.xpose.msra.mxu0 0
    %1027 = vmatprep.subr.bf16.mxu0 0
    %1028 = vmatpush1.bf16.xpose.msra.mxu0 0
    %1029 = vmatprep.subr.bf16.mxu0 0
    %1030 = vmatpush1.bf16.xpose.msra.mxu0 0
    %1031 = vmatprep.subr.bf16.mxu0 0
    %1032 = vmatpush1.bf16.xpose.msra.mxu0 0
    %1033 = vmatprep.subr.bf16.mxu0 0
    %1034 = vmatpush1.bf16.xpose.msra.mxu0 %v1017
    %1035 = vmatprep.subr.bf16.mxu0 0
    %1036 = vmatpush2.bf16.xpose.msra.mxu0 0
    %1037 = vmatprep.subr.bf16.mxu0 0
    %1038 = vmatpush2.bf16.xpose.msra.mxu0 0
    %1039 = vmatprep.subr.bf16.mxu0 0
    %1040 = vmatpush2.bf16.xpose.msra.mxu0 0
    %1041 = vmatprep.subr.bf16.mxu0 0
    %1042 = vmatpush2.bf16.xpose.msra.mxu0 0
    %1043 = vmatprep.subr.bf16.mxu0 0
    %1044 = vmatpush2.bf16.xpose.msra.mxu0 0
    %1045 = vmatprep.subr.bf16.mxu0 0
    %1046 = vmatpush2.bf16.xpose.msra.mxu0 0
    %1047 = vmatprep.subr.bf16.mxu0 0
    %1048 = vmatpush2.bf16.xpose.msra.mxu0 0
    %1049 = vmatprep.subr.bf16.mxu0 0
    %1050 = vmatpush2.bf16.xpose.msra.mxu0 0
    %1051 = vmatprep.mubr.bf16.mxu0 0
    %1052 = vmatmul.mubr.bf16.gmra.mxu0 %v1014
    %v1053 = vpop.f32.mrf.mxu0
    %v1054 = vadd.f32 0.0, %v1053
    %v1055 = vpop.f32.mrf.mxu0
    %v1056 = vpop.f32.mrf.mxu0
    %v1057 = vpop.f32.mrf.mxu0
    %1058 = vdwg.mxu0
    %1060 = vrot.lane.b32.xlu0 %v811, 96
    %v1061 = vpop.permute.xlu0 %1060
    %v1063 = vsel %vm300, %v803, 0
    %v1066 = vsel %vm300, %v1061, 0
    %1068 = vmatprep.subr.bf16.mxu0 0
    %1069 = vmatpush1.bf16.xpose.msra.mxu0 0
    %1070 = vmatprep.subr.bf16.mxu0 0
    %1071 = vmatpush1.bf16.xpose.msra.mxu0 0
    %1072 = vmatprep.subr.bf16.mxu0 0
    %1073 = vmatpush1.bf16.xpose.msra.mxu0 0
    %1074 = vmatprep.subr.bf16.mxu0 0
    %1075 = vmatpush1.bf16.xpose.msra.mxu0 0
    %1076 = vmatprep.subr.bf16.mxu0 0
    %1077 = vmatpush1.bf16.xpose.msra.mxu0 0
    %1078 = vmatprep.subr.bf16.mxu0 0
    %1079 = vmatpush1.bf16.xpose.msra.mxu0 0
    %1080 = vmatprep.subr.bf16.mxu0 0
    %1081 = vmatpush1.bf16.xpose.msra.mxu0 0
    %1082 = vmatprep.subr.bf16.mxu0 0
    %1083 = vmatpush1.bf16.xpose.msra.mxu0 %v1066
    %1084 = vmatprep.subr.bf16.mxu0 0
    %1085 = vmatpush2.bf16.xpose.msra.mxu0 0
    %1086 = vmatprep.subr.bf16.mxu0 0
    %1087 = vmatpush2.bf16.xpose.msra.mxu0 0
    %1088 = vmatprep.subr.bf16.mxu0 0
    %1089 = vmatpush2.bf16.xpose.msra.mxu0 0
    %1090 = vmatprep.subr.bf16.mxu0 0
    %1091 = vmatpush2.bf16.xpose.msra.mxu0 0
    %1092 = vmatprep.subr.bf16.mxu0 0
    %1093 = vmatpush2.bf16.xpose.msra.mxu0 0
    %1094 = vmatprep.subr.bf16.mxu0 0
    %1095 = vmatpush2.bf16.xpose.msra.mxu0 0
    %1096 = vmatprep.subr.bf16.mxu0 0
    %1097 = vmatpush2.bf16.xpose.msra.mxu0 0
    %1098 = vmatprep.subr.bf16.mxu0 0
    %1099 = vmatpush2.bf16.xpose.msra.mxu0 0
    %1100 = vmatprep.mubr.bf16.mxu0 0
    %1101 = vmatmul.mubr.bf16.gmra.mxu0 %v1063
    %v1102 = vpop.f32.mrf.mxu0
    %v1103 = vadd.f32 0.0, %v1102
    %v1104 = vpop.f32.mrf.mxu0
    %v1105 = vpop.f32.mrf.mxu0
    %v1106 = vpop.f32.mrf.mxu0
    %1107 = vdwg.mxu0
    %1109 = vrot.lane.b32.xlu0 %v812, 96
    %v1110 = vpop.permute.xlu0 %1109
    %v1112 = vsel %vm300, %v804, 0
    %v1115 = vsel %vm300, %v1110, 0
    %1117 = vmatprep.subr.bf16.mxu0 0
    %1118 = vmatpush1.bf16.xpose.msra.mxu0 0
    %1119 = vmatprep.subr.bf16.mxu0 0
    %1120 = vmatpush1.bf16.xpose.msra.mxu0 0
    %1121 = vmatprep.subr.bf16.mxu0 0
    %1122 = vmatpush1.bf16.xpose.msra.mxu0 0
    %1123 = vmatprep.subr.bf16.mxu0 0
    %1124 = vmatpush1.bf16.xpose.msra.mxu0 0
    %1125 = vmatprep.subr.bf16.mxu0 0
    %1126 = vmatpush1.bf16.xpose.msra.mxu0 0
    %1127 = vmatprep.subr.bf16.mxu0 0
    %1128 = vmatpush1.bf16.xpose.msra.mxu0 0
    %1129 = vmatprep.subr.bf16.mxu0 0
    %1130 = vmatpush1.bf16.xpose.msra.mxu0 0
    %1131 = vmatprep.subr.bf16.mxu0 0
    %1132 = vmatpush1.bf16.xpose.msra.mxu0 %v1115
    %1133 = vmatprep.subr.bf16.mxu0 0
    %1134 = vmatpush2.bf16.xpose.msra.mxu0 0
    %1135 = vmatprep.subr.bf16.mxu0 0
    %1136 = vmatpush2.bf16.xpose.msra.mxu0 0
    %1137 = vmatprep.subr.bf16.mxu0 0
    %1138 = vmatpush2.bf16.xpose.msra.mxu0 0
    %1139 = vmatprep.subr.bf16.mxu0 0
    %1140 = vmatpush2.bf16.xpose.msra.mxu0 0
    %1141 = vmatprep.subr.bf16.mxu0 0
    %1142 = vmatpush2.bf16.xpose.msra.mxu0 0
    %1143 = vmatprep.subr.bf16.mxu0 0
    %1144 = vmatpush2.bf16.xpose.msra.mxu0 0
    %1145 = vmatprep.subr.bf16.mxu0 0
    %1146 = vmatpush2.bf16.xpose.msra.mxu0 0
    %1147 = vmatprep.subr.bf16.mxu0 0
    %1148 = vmatpush2.bf16.xpose.msra.mxu0 0
    %1149 = vmatprep.mubr.bf16.mxu0 0
    %1150 = vmatmul.mubr.bf16.gmra.mxu0 %v1112
    %v1151 = vpop.f32.mrf.mxu0
    %v1152 = vadd.f32 0.0, %v1151
    %v1153 = vpop.f32.mrf.mxu0
    %v1154 = vpop.f32.mrf.mxu0
    %v1155 = vpop.f32.mrf.mxu0
    %1156 = vdwg.mxu0
    %1158 = vrot.lane.b32.xlu0 %v813, 96
    %v1159 = vpop.permute.xlu0 %1158
    %v1161 = vsel %vm300, %v805, 0
    %v1164 = vsel %vm300, %v1159, 0
    %1166 = vmatprep.subr.bf16.mxu0 0
    %1167 = vmatpush1.bf16.xpose.msra.mxu0 0
    %1168 = vmatprep.subr.bf16.mxu0 0
    %1169 = vmatpush1.bf16.xpose.msra.mxu0 0
    %1170 = vmatprep.subr.bf16.mxu0 0
    %1171 = vmatpush1.bf16.xpose.msra.mxu0 0
    %1172 = vmatprep.subr.bf16.mxu0 0
    %1173 = vmatpush1.bf16.xpose.msra.mxu0 0
    %1174 = vmatprep.subr.bf16.mxu0 0
    %1175 = vmatpush1.bf16.xpose.msra.mxu0 0
    %1176 = vmatprep.subr.bf16.mxu0 0
    %1177 = vmatpush1.bf16.xpose.msra.mxu0 0
    %1178 = vmatprep.subr.bf16.mxu0 0
    %1179 = vmatpush1.bf16.xpose.msra.mxu0 0
    %1180 = vmatprep.subr.bf16.mxu0 0
    %1181 = vmatpush1.bf16.xpose.msra.mxu0 %v1164
    %1182 = vmatprep.subr.bf16.mxu0 0
    %1183 = vmatpush2.bf16.xpose.msra.mxu0 0
    %1184 = vmatprep.subr.bf16.mxu0 0
    %1185 = vmatpush2.bf16.xpose.msra.mxu0 0
    %1186 = vmatprep.subr.bf16.mxu0 0
    %1187 = vmatpush2.bf16.xpose.msra.mxu0 0
    %1188 = vmatprep.subr.bf16.mxu0 0
    %1189 = vmatpush2.bf16.xpose.msra.mxu0 0
    %1190 = vmatprep.subr.bf16.mxu0 0
    %1191 = vmatpush2.bf16.xpose.msra.mxu0 0
    %1192 = vmatprep.subr.bf16.mxu0 0
    %1193 = vmatpush2.bf16.xpose.msra.mxu0 0
    %1194 = vmatprep.subr.bf16.mxu0 0
    %1195 = vmatpush2.bf16.xpose.msra.mxu0 0
    %1196 = vmatprep.subr.bf16.mxu0 0
    %1197 = vmatpush2.bf16.xpose.msra.mxu0 0
    %1198 = vmatprep.mubr.bf16.mxu0 0
    %1199 = vmatmul.mubr.bf16.gmra.mxu0 %v1161
    %v1200 = vpop.f32.mrf.mxu0
    %v1201 = vadd.f32 0.0, %v1200
    %v1202 = vpop.f32.mrf.mxu0
    %v1203 = vpop.f32.mrf.mxu0
    %v1204 = vpop.f32.mrf.mxu0
    %1205 = vdwg.mxu0
    %v1206 = vmul.f32 %v858, 0.35355338
    %v1207 = vmul.f32 %v907, 0.35355338
    %v1208 = vmul.f32 %v956, 0.35355338
    %v1209 = vmul.f32 %v1005, 0.35355338
    %v1210 = vmul.f32 %v1054, 0.35355338
    %v1211 = vmul.f32 %v1103, 0.35355338
    %v1212 = vmul.f32 %v1152, 0.35355338
    %v1213 = vmul.f32 %v1201, 0.35355338
    %v1214 = vld [vmem:[#allocation2] sm:$0xff]
    %v1215 = vld [vmem:[#allocation2 + $0x8] sm:$0xff]
    %v1216 = vadd.f32 %v1206, %v1214
    %v1217 = vadd.f32 %v1207, %v1214
    %v1218 = vadd.f32 %v1208, %v1214
    %v1219 = vadd.f32 %v1209, %v1214
    %v1220 = vadd.f32 %v1210, %v1215
    %v1221 = vadd.f32 %v1211, %v1215
    %v1222 = vadd.f32 %v1212, %v1215
    %v1223 = vadd.f32 %v1213, %v1215
    %vm1224 = vcmask 130048
    %v1225 = vsel %vm1224, %v1216, -inf
    %1226 = vmax.xlane.f32.xlu0 %v1225
    %v1227 = vpop.xlane.xlu0 %1226
    %v1228 = vsel %vm1224, %v1217, -inf
    %1229 = vmax.xlane.f32.xlu0 %v1228
    %v1230 = vpop.xlane.xlu0 %1229
    %v1231 = vsel %vm1224, %v1218, -inf
    %1232 = vmax.xlane.f32.xlu0 %v1231
    %v1233 = vpop.xlane.xlu0 %1232
    %v1234 = vsel %vm1224, %v1219, -inf
    %1235 = vmax.xlane.f32.xlu0 %v1234
    %v1236 = vpop.xlane.xlu0 %1235
    %v1237 = vsel %vm1224, %v1220, -inf
    %1238 = vmax.xlane.f32.xlu0 %v1237
    %v1239 = vpop.xlane.xlu0 %1238
    %v1240 = vsel %vm1224, %v1221, -inf
    %1241 = vmax.xlane.f32.xlu0 %v1240
    %v1242 = vpop.xlane.xlu0 %1241
    %v1243 = vsel %vm1224, %v1222, -inf
    %1244 = vmax.xlane.f32.xlu0 %v1243
    %v1245 = vpop.xlane.xlu0 %1244
    %v1246 = vsel %vm1224, %v1223, -inf
    %1247 = vmax.xlane.f32.xlu0 %v1246
    %v1248 = vpop.xlane.xlu0 %1247
    %v1249 = vsub.f32 %v1216, %v1227
    %v1250 = vsub.f32 %v1217, %v1230
    %v1251 = vsub.f32 %v1218, %v1233
    %v1252 = vsub.f32 %v1219, %v1236
    %v1253 = vsub.f32 %v1220, %v1239
    %v1254 = vsub.f32 %v1221, %v1242
    %v1255 = vsub.f32 %v1222, %v1245
    %v1256 = vsub.f32 %v1223, %v1248
    %v1257 = vmul.f32 %v1249, 1.442695
    %v1258 = vpow.pop %v1257
    %v1259 = vmul.f32 %v1250, 1.442695
    %v1260 = vpow.pop %v1259
    %v1261 = vmul.f32 %v1251, 1.442695
    %v1262 = vpow.pop %v1261
    %v1263 = vmul.f32 %v1252, 1.442695
    %v1264 = vpow.pop %v1263
    %v1265 = vmul.f32 %v1253, 1.442695
    %v1266 = vpow.pop %v1265
    %v1267 = vmul.f32 %v1254, 1.442695
    %v1268 = vpow.pop %v1267
    %v1269 = vmul.f32 %v1255, 1.442695
    %v1270 = vpow.pop %v1269
    %v1271 = vmul.f32 %v1256, 1.442695
    %v1272 = vpow.pop %v1271
    %v1273 = vsel %vm1224, %v1258, 0.0
    %1274 = vadd.xlane.f32.xlu0 %v1273
    %v1275 = vpop.xlane.xlu0 %1274
    %v1276 = vsel %vm1224, %v1260, 0.0
    %1277 = vadd.xlane.f32.xlu0 %v1276
    %v1278 = vpop.xlane.xlu0 %1277
    %v1279 = vsel %vm1224, %v1262, 0.0
    %1280 = vadd.xlane.f32.xlu0 %v1279
    %v1281 = vpop.xlane.xlu0 %1280
    %v1282 = vsel %vm1224, %v1264, 0.0
    %1283 = vadd.xlane.f32.xlu0 %v1282
    %v1284 = vpop.xlane.xlu0 %1283
    %v1285 = vsel %vm1224, %v1266, 0.0
    %1286 = vadd.xlane.f32.xlu0 %v1285
    %v1287 = vpop.xlane.xlu0 %1286
    %v1288 = vsel %vm1224, %v1268, 0.0
    %1289 = vadd.xlane.f32.xlu0 %v1288
    %v1290 = vpop.xlane.xlu0 %1289
    %v1291 = vsel %vm1224, %v1270, 0.0
    %1292 = vadd.xlane.f32.xlu0 %v1291
    %v1293 = vpop.xlane.xlu0 %1292
    %v1294 = vsel %vm1224, %v1272, 0.0
    %1295 = vadd.xlane.f32.xlu0 %v1294
    %v1296 = vpop.xlane.xlu0 %1295
    %v1297 = vrcp.pop %v1275
    %v1298 = vmul.f32 %v1258, %v1297
    %v1299 = vrcp.pop %v1278
    %v1300 = vmul.f32 %v1260, %v1299
    %v1301 = vrcp.pop %v1281
    %v1302 = vmul.f32 %v1262, %v1301
    %v1303 = vrcp.pop %v1284
    %v1304 = vmul.f32 %v1264, %v1303
    %v1305 = vrcp.pop %v1287
    %v1306 = vmul.f32 %v1266, %v1305
    %v1307 = vrcp.pop %v1290
    %v1308 = vmul.f32 %v1268, %v1307
    %v1309 = vrcp.pop %v1293
    %v1310 = vmul.f32 %v1270, %v1309
    %v1311 = vrcp.pop %v1296
    %v1312 = vmul.f32 %v1272, %v1311
    %v1313 = vpack.c.bf16 %v1298, %v1298
    %v1314 = vpack.c.bf16 %v1300, %v1300
    %v1315 = vpack.c.bf16 %v1302, %v1302
    %v1316 = vpack.c.bf16 %v1304, %v1304
    %v1317 = vpack.c.bf16 %v1306, %v1306
    %v1318 = vpack.c.bf16 %v1308, %v1308
    %v1319 = vpack.c.bf16 %v1310, %v1310
    %v1320 = vpack.c.bf16 %v1312, %v1312
    %v1321 = vpack.c.bf16 %v229, %v226
    %v1322 = vpack.c.bf16 %v265, %v263
    %v1323 = vpack.c.bf16 %v271, %v269
    %v1324 = vpack.c.bf16 %v277, %v275
    %v1325 = vpack.c.bf16 %v237, %v234
    %v1326 = vpack.c.bf16 %v285, %v283
    %v1327 = vpack.c.bf16 %v291, %v289
    %v1328 = vpack.c.bf16 %v297, %v295
    %1330 = vrot.lane.b32.xlu0 %v1321, 64
    %v1331 = vpop.permute.xlu0 %1330
    %v1334 = vsel %vm1224, %v1313, 0
    %1336 = vmatprep.subr.bf16.mxu0 0
    %1337 = vmatpush1.bf16.msra.mxu0 0
    %1338 = vmatprep.subr.bf16.mxu0 0
    %1339 = vmatpush1.bf16.msra.mxu0 0
    %1340 = vmatprep.subr.bf16.mxu0 0
    %1341 = vmatpush1.bf16.msra.mxu0 0
    %1342 = vmatprep.subr.bf16.mxu0 0
    %1343 = vmatpush1.bf16.msra.mxu0 0
    %1344 = vmatprep.subr.bf16.mxu0 0
    %1345 = vmatpush1.bf16.msra.mxu0 0
    %1346 = vmatprep.subr.bf16.mxu0 0
    %1347 = vmatpush1.bf16.msra.mxu0 0
    %1348 = vmatprep.subr.bf16.mxu0 0
    %1349 = vmatpush1.bf16.msra.mxu0 0
    %1350 = vmatprep.subr.bf16.mxu0 0
    %1351 = vmatpush1.bf16.msra.mxu0 %v1331
    %1352 = vmatprep.subr.bf16.mxu0 0
    %1353 = vmatpush2.bf16.msra.mxu0 0
    %1354 = vmatprep.subr.bf16.mxu0 0
    %1355 = vmatpush2.bf16.msra.mxu0 0
    %1356 = vmatprep.subr.bf16.mxu0 0
    %1357 = vmatpush2.bf16.msra.mxu0 0
    %1358 = vmatprep.subr.bf16.mxu0 0
    %1359 = vmatpush2.bf16.msra.mxu0 0
    %1360 = vmatprep.subr.bf16.mxu0 0
    %1361 = vmatpush2.bf16.msra.mxu0 0
    %1362 = vmatprep.subr.bf16.mxu0 0
    %1363 = vmatpush2.bf16.msra.mxu0 0
    %1364 = vmatprep.subr.bf16.mxu0 0
    %1365 = vmatpush2.bf16.msra.mxu0 0
    %1366 = vmatprep.subr.bf16.mxu0 0
    %1367 = vmatpush2.bf16.msra.mxu0 0
    %1368 = vmatprep.mubr.bf16.mxu0 0
    %1369 = vmatmul.mubr.bf16.gmra.mxu0 %v1334
    %v1370 = vpop.f32.mrf.mxu0
    %v1371 = vadd.f32 0.0, %v1370
    %v1372 = vpop.f32.mrf.mxu0
    %v1373 = vpop.f32.mrf.mxu0
    %v1374 = vpop.f32.mrf.mxu0
    %1375 = vdwg.mxu0
    %1377 = vrot.lane.b32.xlu0 %v1322, 64
    %v1378 = vpop.permute.xlu0 %1377
    %v1381 = vsel %vm1224, %v1314, 0
    %1383 = vmatprep.subr.bf16.mxu0 0
    %1384 = vmatpush1.bf16.msra.mxu0 0
    %1385 = vmatprep.subr.bf16.mxu0 0
    %1386 = vmatpush1.bf16.msra.mxu0 0
    %1387 = vmatprep.subr.bf16.mxu0 0
    %1388 = vmatpush1.bf16.msra.mxu0 0
    %1389 = vmatprep.subr.bf16.mxu0 0
    %1390 = vmatpush1.bf16.msra.mxu0 0
    %1391 = vmatprep.subr.bf16.mxu0 0
    %1392 = vmatpush1.bf16.msra.mxu0 0
    %1393 = vmatprep.subr.bf16.mxu0 0
    %1394 = vmatpush1.bf16.msra.mxu0 0
    %1395 = vmatprep.subr.bf16.mxu0 0
    %1396 = vmatpush1.bf16.msra.mxu0 0
    %1397 = vmatprep.subr.bf16.mxu0 0
    %1398 = vmatpush1.bf16.msra.mxu0 %v1378
    %1399 = vmatprep.subr.bf16.mxu0 0
    %1400 = vmatpush2.bf16.msra.mxu0 0
    %1401 = vmatprep.subr.bf16.mxu0 0
    %1402 = vmatpush2.bf16.msra.mxu0 0
    %1403 = vmatprep.subr.bf16.mxu0 0
    %1404 = vmatpush2.bf16.msra.mxu0 0
    %1405 = vmatprep.subr.bf16.mxu0 0
    %1406 = vmatpush2.bf16.msra.mxu0 0
    %1407 = vmatprep.subr.bf16.mxu0 0
    %1408 = vmatpush2.bf16.msra.mxu0 0
    %1409 = vmatprep.subr.bf16.mxu0 0
    %1410 = vmatpush2.bf16.msra.mxu0 0
    %1411 = vmatprep.subr.bf16.mxu0 0
    %1412 = vmatpush2.bf16.msra.mxu0 0
    %1413 = vmatprep.subr.bf16.mxu0 0
    %1414 = vmatpush2.bf16.msra.mxu0 0
    %1415 = vmatprep.mubr.bf16.mxu0 0
    %1416 = vmatmul.mubr.bf16.gmra.mxu0 %v1381
    %v1417 = vpop.f32.mrf.mxu0
    %v1418 = vadd.f32 0.0, %v1417
    %v1419 = vpop.f32.mrf.mxu0
    %v1420 = vpop.f32.mrf.mxu0
    %v1421 = vpop.f32.mrf.mxu0
    %1422 = vdwg.mxu0
    %1424 = vrot.lane.b32.xlu0 %v1323, 64
    %v1425 = vpop.permute.xlu0 %1424
    %v1428 = vsel %vm1224, %v1315, 0
    %1430 = vmatprep.subr.bf16.mxu0 0
    %1431 = vmatpush1.bf16.msra.mxu0 0
    %1432 = vmatprep.subr.bf16.mxu0 0
    %1433 = vmatpush1.bf16.msra.mxu0 0
    %1434 = vmatprep.subr.bf16.mxu0 0
    %1435 = vmatpush1.bf16.msra.mxu0 0
    %1436 = vmatprep.subr.bf16.mxu0 0
    %1437 = vmatpush1.bf16.msra.mxu0 0
    %1438 = vmatprep.subr.bf16.mxu0 0
    %1439 = vmatpush1.bf16.msra.mxu0 0
    %1440 = vmatprep.subr.bf16.mxu0 0
    %1441 = vmatpush1.bf16.msra.mxu0 0
    %1442 = vmatprep.subr.bf16.mxu0 0
    %1443 = vmatpush1.bf16.msra.mxu0 0
    %1444 = vmatprep.subr.bf16.mxu0 0
    %1445 = vmatpush1.bf16.msra.mxu0 %v1425
    %1446 = vmatprep.subr.bf16.mxu0 0
    %1447 = vmatpush2.bf16.msra.mxu0 0
    %1448 = vmatprep.subr.bf16.mxu0 0
    %1449 = vmatpush2.bf16.msra.mxu0 0
    %1450 = vmatprep.subr.bf16.mxu0 0
    %1451 = vmatpush2.bf16.msra.mxu0 0
    %1452 = vmatprep.subr.bf16.mxu0 0
    %1453 = vmatpush2.bf16.msra.mxu0 0
    %1454 = vmatprep.subr.bf16.mxu0 0
    %1455 = vmatpush2.bf16.msra.mxu0 0
    %1456 = vmatprep.subr.bf16.mxu0 0
    %1457 = vmatpush2.bf16.msra.mxu0 0
    %1458 = vmatprep.subr.bf16.mxu0 0
    %1459 = vmatpush2.bf16.msra.mxu0 0
    %1460 = vmatprep.subr.bf16.mxu0 0
    %1461 = vmatpush2.bf16.msra.mxu0 0
    %1462 = vmatprep.mubr.bf16.mxu0 0
    %1463 = vmatmul.mubr.bf16.gmra.mxu0 %v1428
    %v1464 = vpop.f32.mrf.mxu0
    %v1465 = vadd.f32 0.0, %v1464
    %v1466 = vpop.f32.mrf.mxu0
    %v1467 = vpop.f32.mrf.mxu0
    %v1468 = vpop.f32.mrf.mxu0
    %1469 = vdwg.mxu0
    %1471 = vrot.lane.b32.xlu0 %v1324, 64
    %v1472 = vpop.permute.xlu0 %1471
    %v1475 = vsel %vm1224, %v1316, 0
    %1477 = vmatprep.subr.bf16.mxu0 0
    %1478 = vmatpush1.bf16.msra.mxu0 0
    %1479 = vmatprep.subr.bf16.mxu0 0
    %1480 = vmatpush1.bf16.msra.mxu0 0
    %1481 = vmatprep.subr.bf16.mxu0 0
    %1482 = vmatpush1.bf16.msra.mxu0 0
    %1483 = vmatprep.subr.bf16.mxu0 0
    %1484 = vmatpush1.bf16.msra.mxu0 0
    %1485 = vmatprep.subr.bf16.mxu0 0
    %1486 = vmatpush1.bf16.msra.mxu0 0
    %1487 = vmatprep.subr.bf16.mxu0 0
    %1488 = vmatpush1.bf16.msra.mxu0 0
    %1489 = vmatprep.subr.bf16.mxu0 0
    %1490 = vmatpush1.bf16.msra.mxu0 0
    %1491 = vmatprep.subr.bf16.mxu0 0
    %1492 = vmatpush1.bf16.msra.mxu0 %v1472
    %1493 = vmatprep.subr.bf16.mxu0 0
    %1494 = vmatpush2.bf16.msra.mxu0 0
    %1495 = vmatprep.subr.bf16.mxu0 0
    %1496 = vmatpush2.bf16.msra.mxu0 0
    %1497 = vmatprep.subr.bf16.mxu0 0
    %1498 = vmatpush2.bf16.msra.mxu0 0
    %1499 = vmatprep.subr.bf16.mxu0 0
    %1500 = vmatpush2.bf16.msra.mxu0 0
    %1501 = vmatprep.subr.bf16.mxu0 0
    %1502 = vmatpush2.bf16.msra.mxu0 0
    %1503 = vmatprep.subr.bf16.mxu0 0
    %1504 = vmatpush2.bf16.msra.mxu0 0
    %1505 = vmatprep.subr.bf16.mxu0 0
    %1506 = vmatpush2.bf16.msra.mxu0 0
    %1507 = vmatprep.subr.bf16.mxu0 0
    %1508 = vmatpush2.bf16.msra.mxu0 0
    %1509 = vmatprep.mubr.bf16.mxu0 0
    %1510 = vmatmul.mubr.bf16.gmra.mxu0 %v1475
    %v1511 = vpop.f32.mrf.mxu0
    %v1512 = vadd.f32 0.0, %v1511
    %v1513 = vpop.f32.mrf.mxu0
    %v1514 = vpop.f32.mrf.mxu0
    %v1515 = vpop.f32.mrf.mxu0
    %1516 = vdwg.mxu0
    %1518 = vrot.lane.b32.xlu0 %v1325, 64
    %v1519 = vpop.permute.xlu0 %1518
    %v1522 = vsel %vm1224, %v1317, 0
    %1524 = vmatprep.subr.bf16.mxu0 0
    %1525 = vmatpush1.bf16.msra.mxu0 0
    %1526 = vmatprep.subr.bf16.mxu0 0
    %1527 = vmatpush1.bf16.msra.mxu0 0
    %1528 = vmatprep.subr.bf16.mxu0 0
    %1529 = vmatpush1.bf16.msra.mxu0 0
    %1530 = vmatprep.subr.bf16.mxu0 0
    %1531 = vmatpush1.bf16.msra.mxu0 0
    %1532 = vmatprep.subr.bf16.mxu0 0
    %1533 = vmatpush1.bf16.msra.mxu0 0
    %1534 = vmatprep.subr.bf16.mxu0 0
    %1535 = vmatpush1.bf16.msra.mxu0 0
    %1536 = vmatprep.subr.bf16.mxu0 0
    %1537 = vmatpush1.bf16.msra.mxu0 0
    %1538 = vmatprep.subr.bf16.mxu0 0
    %1539 = vmatpush1.bf16.msra.mxu0 %v1519
    %1540 = vmatprep.subr.bf16.mxu0 0
    %1541 = vmatpush2.bf16.msra.mxu0 0
    %1542 = vmatprep.subr.bf16.mxu0 0
    %1543 = vmatpush2.bf16.msra.mxu0 0
    %1544 = vmatprep.subr.bf16.mxu0 0
    %1545 = vmatpush2.bf16.msra.mxu0 0
    %1546 = vmatprep.subr.bf16.mxu0 0
    %1547 = vmatpush2.bf16.msra.mxu0 0
    %1548 = vmatprep.subr.bf16.mxu0 0
    %1549 = vmatpush2.bf16.msra.mxu0 0
    %1550 = vmatprep.subr.bf16.mxu0 0
    %1551 = vmatpush2.bf16.msra.mxu0 0
    %1552 = vmatprep.subr.bf16.mxu0 0
    %1553 = vmatpush2.bf16.msra.mxu0 0
    %1554 = vmatprep.subr.bf16.mxu0 0
    %1555 = vmatpush2.bf16.msra.mxu0 0
    %1556 = vmatprep.mubr.bf16.mxu0 0
    %1557 = vmatmul.mubr.bf16.gmra.mxu0 %v1522
    %v1558 = vpop.f32.mrf.mxu0
    %v1559 = vadd.f32 0.0, %v1558
    %v1560 = vpop.f32.mrf.mxu0
    %v1561 = vpop.f32.mrf.mxu0
    %v1562 = vpop.f32.mrf.mxu0
    %1563 = vdwg.mxu0
    %1565 = vrot.lane.b32.xlu0 %v1326, 64
    %v1566 = vpop.permute.xlu0 %1565
    %v1569 = vsel %vm1224, %v1318, 0
    %1571 = vmatprep.subr.bf16.mxu0 0
    %1572 = vmatpush1.bf16.msra.mxu0 0
    %1573 = vmatprep.subr.bf16.mxu0 0
    %1574 = vmatpush1.bf16.msra.mxu0 0
    %1575 = vmatprep.subr.bf16.mxu0 0
    %1576 = vmatpush1.bf16.msra.mxu0 0
    %1577 = vmatprep.subr.bf16.mxu0 0
    %1578 = vmatpush1.bf16.msra.mxu0 0
    %1579 = vmatprep.subr.bf16.mxu0 0
    %1580 = vmatpush1.bf16.msra.mxu0 0
    %1581 = vmatprep.subr.bf16.mxu0 0
    %1582 = vmatpush1.bf16.msra.mxu0 0
    %1583 = vmatprep.subr.bf16.mxu0 0
    %1584 = vmatpush1.bf16.msra.mxu0 0
    %1585 = vmatprep.subr.bf16.mxu0 0
    %1586 = vmatpush1.bf16.msra.mxu0 %v1566
    %1587 = vmatprep.subr.bf16.mxu0 0
    %1588 = vmatpush2.bf16.msra.mxu0 0
    %1589 = vmatprep.subr.bf16.mxu0 0
    %1590 = vmatpush2.bf16.msra.mxu0 0
    %1591 = vmatprep.subr.bf16.mxu0 0
    %1592 = vmatpush2.bf16.msra.mxu0 0
    %1593 = vmatprep.subr.bf16.mxu0 0
    %1594 = vmatpush2.bf16.msra.mxu0 0
    %1595 = vmatprep.subr.bf16.mxu0 0
    %1596 = vmatpush2.bf16.msra.mxu0 0
    %1597 = vmatprep.subr.bf16.mxu0 0
    %1598 = vmatpush2.bf16.msra.mxu0 0
    %1599 = vmatprep.subr.bf16.mxu0 0
    %1600 = vmatpush2.bf16.msra.mxu0 0
    %1601 = vmatprep.subr.bf16.mxu0 0
    %1602 = vmatpush2.bf16.msra.mxu0 0
    %1603 = vmatprep.mubr.bf16.mxu0 0
    %1604 = vmatmul.mubr.bf16.gmra.mxu0 %v1569
    %v1605 = vpop.f32.mrf.mxu0
    %v1606 = vadd.f32 0.0, %v1605
    %v1607 = vpop.f32.mrf.mxu0
    %v1608 = vpop.f32.mrf.mxu0
    %v1609 = vpop.f32.mrf.mxu0
    %1610 = vdwg.mxu0
    %1612 = vrot.lane.b32.xlu0 %v1327, 64
    %v1613 = vpop.permute.xlu0 %1612
    %v1616 = vsel %vm1224, %v1319, 0
    %1618 = vmatprep.subr.bf16.mxu0 0
    %1619 = vmatpush1.bf16.msra.mxu0 0
    %1620 = vmatprep.subr.bf16.mxu0 0
    %1621 = vmatpush1.bf16.msra.mxu0 0
    %1622 = vmatprep.subr.bf16.mxu0 0
    %1623 = vmatpush1.bf16.msra.mxu0 0
    %1624 = vmatprep.subr.bf16.mxu0 0
    %1625 = vmatpush1.bf16.msra.mxu0 0
    %1626 = vmatprep.subr.bf16.mxu0 0
    %1627 = vmatpush1.bf16.msra.mxu0 0
    %1628 = vmatprep.subr.bf16.mxu0 0
    %1629 = vmatpush1.bf16.msra.mxu0 0
    %1630 = vmatprep.subr.bf16.mxu0 0
    %1631 = vmatpush1.bf16.msra.mxu0 0
    %1632 = vmatprep.subr.bf16.mxu0 0
    %1633 = vmatpush1.bf16.msra.mxu0 %v1613
    %1634 = vmatprep.subr.bf16.mxu0 0
    %1635 = vmatpush2.bf16.msra.mxu0 0
    %1636 = vmatprep.subr.bf16.mxu0 0
    %1637 = vmatpush2.bf16.msra.mxu0 0
    %1638 = vmatprep.subr.bf16.mxu0 0
    %1639 = vmatpush2.bf16.msra.mxu0 0
    %1640 = vmatprep.subr.bf16.mxu0 0
    %1641 = vmatpush2.bf16.msra.mxu0 0
    %1642 = vmatprep.subr.bf16.mxu0 0
    %1643 = vmatpush2.bf16.msra.mxu0 0
    %1644 = vmatprep.subr.bf16.mxu0 0
    %1645 = vmatpush2.bf16.msra.mxu0 0
    %1646 = vmatprep.subr.bf16.mxu0 0
    %1647 = vmatpush2.bf16.msra.mxu0 0
    %1648 = vmatprep.subr.bf16.mxu0 0
    %1649 = vmatpush2.bf16.msra.mxu0 0
    %1650 = vmatprep.mubr.bf16.mxu0 0
    %1651 = vmatmul.mubr.bf16.gmra.mxu0 %v1616
    %v1652 = vpop.f32.mrf.mxu0
    %v1653 = vadd.f32 0.0, %v1652
    %v1654 = vpop.f32.mrf.mxu0
    %v1655 = vpop.f32.mrf.mxu0
    %v1656 = vpop.f32.mrf.mxu0
    %1657 = vdwg.mxu0
    %1659 = vrot.lane.b32.xlu0 %v1328, 64
    %v1660 = vpop.permute.xlu0 %1659
    %v1663 = vsel %vm1224, %v1320, 0
    %1665 = vmatprep.subr.bf16.mxu0 0
    %1666 = vmatpush1.bf16.msra.mxu0 0
    %1667 = vmatprep.subr.bf16.mxu0 0
    %1668 = vmatpush1.bf16.msra.mxu0 0
    %1669 = vmatprep.subr.bf16.mxu0 0
    %1670 = vmatpush1.bf16.msra.mxu0 0
    %1671 = vmatprep.subr.bf16.mxu0 0
    %1672 = vmatpush1.bf16.msra.mxu0 0
    %1673 = vmatprep.subr.bf16.mxu0 0
    %1674 = vmatpush1.bf16.msra.mxu0 0
    %1675 = vmatprep.subr.bf16.mxu0 0
    %1676 = vmatpush1.bf16.msra.mxu0 0
    %1677 = vmatprep.subr.bf16.mxu0 0
    %1678 = vmatpush1.bf16.msra.mxu0 0
    %1679 = vmatprep.subr.bf16.mxu0 0
    %1680 = vmatpush1.bf16.msra.mxu0 %v1660
    %1681 = vmatprep.subr.bf16.mxu0 0
    %1682 = vmatpush2.bf16.msra.mxu0 0
    %1683 = vmatprep.subr.bf16.mxu0 0
    %1684 = vmatpush2.bf16.msra.mxu0 0
    %1685 = vmatprep.subr.bf16.mxu0 0
    %1686 = vmatpush2.bf16.msra.mxu0 0
    %1687 = vmatprep.subr.bf16.mxu0 0
    %1688 = vmatpush2.bf16.msra.mxu0 0
    %1689 = vmatprep.subr.bf16.mxu0 0
    %1690 = vmatpush2.bf16.msra.mxu0 0
    %1691 = vmatprep.subr.bf16.mxu0 0
    %1692 = vmatpush2.bf16.msra.mxu0 0
    %1693 = vmatprep.subr.bf16.mxu0 0
    %1694 = vmatpush2.bf16.msra.mxu0 0
    %1695 = vmatprep.subr.bf16.mxu0 0
    %1696 = vmatpush2.bf16.msra.mxu0 0
    %1697 = vmatprep.mubr.bf16.mxu0 0
    %1698 = vmatmul.mubr.bf16.gmra.mxu0 %v1663
    %v1699 = vpop.f32.mrf.mxu0
    %v1700 = vadd.f32 0.0, %v1699
    %v1701 = vpop.f32.mrf.mxu0
    %v1702 = vpop.f32.mrf.mxu0
    %v1703 = vpop.f32.mrf.mxu0
    %1704 = vdwg.mxu0
    %1706 = vrot.lane.b32.xlu0 %v1418, 8
    %v1707 = vpop.permute.xlu0 %1706
    %1710 = vrot.lane.b32.xlu0 %v1465, 16
    %v1711 = vpop.permute.xlu0 %1710
    %1714 = vrot.lane.b32.xlu0 %v1512, 24
    %v1715 = vpop.permute.xlu0 %1714
    %v1717 = vsel %vm300, %v1371, %v1707
    %v1718 = vsel %vm1224, %v1717, %v1711
    %vm1719 = vcmask 195584
    %v1720 = vsel %vm1719, %v1718, %v1715
    %1722 = vrot.lane.b32.xlu0 %v1606, 8
    %v1723 = vpop.permute.xlu0 %1722
    %1726 = vrot.lane.b32.xlu0 %v1653, 16
    %v1727 = vpop.permute.xlu0 %1726
    %1730 = vrot.lane.b32.xlu0 %v1700, 24
    %v1731 = vpop.permute.xlu0 %1730
    %v1733 = vsel %vm300, %v1559, %v1723
    %v1734 = vsel %vm1224, %v1733, %v1727
    %v1735 = vsel %vm1719, %v1734, %v1731
    %v1736 = vpack.c.bf16 %v1735, %v1720
    %v1737 = vld [vmem:[#allocation7] sm:$0xf]
    %v1738 = vld [vmem:[#allocation7 + $0x4] sm:$0xf]
    %v1739 = vld [vmem:[#allocation7 + $0x8] sm:$0xf]
    %v1740 = vld [vmem:[#allocation7 + $0xc] sm:$0xf]
    %v1741 = vlaneseq
    %v1742 = vshrl.u32 %v1741, 7
    %v1743 = vsub.s32 0, %v1742
    %v1744 = vrot.slane %v95, %v1743
    %v1749 = vunpack.c.l.b16 %v1737
    %v1750 = vunpack.c.l.b16 %v1738
    %v1751 = vunpack.c.l.b16 %v1739
    %v1752 = vunpack.c.l.b16 %v1740
    %v1753 = vpack.c.b16 %v1750, %v1749
    %v1754 = vpack.c.b16 %v1752, %v1751
    %v1758 = vsel %vm107, %v1736, 0
    %1760 = vmatprep.subr.bf16.mxu0 0
    %1761 = vmatpush1.bf16.msra.mxu0 0
    %1762 = vmatprep.subr.bf16.mxu0 0
    %1763 = vmatpush1.bf16.msra.mxu0 0
    %1764 = vmatprep.subr.bf16.mxu0 0
    %1765 = vmatpush1.bf16.msra.mxu0 0
    %1766 = vmatprep.subr.bf16.mxu0 0
    %1767 = vmatpush1.bf16.msra.mxu0 0
    %1768 = vmatprep.subr.bf16.mxu0 0
    %1769 = vmatpush1.bf16.msra.mxu0 0
    %1770 = vmatprep.subr.bf16.mxu0 0
    %1771 = vmatpush1.bf16.msra.mxu0 0
    %1772 = vmatprep.subr.bf16.mxu0 0
    %1773 = vmatpush1.bf16.msra.mxu0 %v1754
    %1774 = vmatprep.subr.bf16.mxu0 0
    %1775 = vmatpush1.bf16.msra.mxu0 %v1753
    %1776 = vmatprep.subr.bf16.mxu0 0
    %1777 = vmatpush2.bf16.msra.mxu0 0
    %1778 = vmatprep.subr.bf16.mxu0 0
    %1779 = vmatpush2.bf16.msra.mxu0 0
    %1780 = vmatprep.subr.bf16.mxu0 0
    %1781 = vmatpush2.bf16.msra.mxu0 0
    %1782 = vmatprep.subr.bf16.mxu0 0
    %1783 = vmatpush2.bf16.msra.mxu0 0
    %1784 = vmatprep.subr.bf16.mxu0 0
    %1785 = vmatpush2.bf16.msra.mxu0 0
    %1786 = vmatprep.subr.bf16.mxu0 0
    %1787 = vmatpush2.bf16.msra.mxu0 0
    %1788 = vmatprep.subr.bf16.mxu0 0
    %1789 = vmatpush2.bf16.msra.mxu0 0
    %1790 = vmatprep.subr.bf16.mxu0 0
    %1791 = vmatpush2.bf16.msra.mxu0 0
    %1792 = vmatprep.mubr.bf16.mxu0 0
    %1793 = vmatmul.mubr.bf16.gmra.mxu0 %v1758
    %v1794 = vpop.f32.mrf.mxu0
    %v1795 = vadd.f32 %v1744, %v1794
    %v1796 = vpop.f32.mrf.mxu0
    %v1797 = vpop.f32.mrf.mxu0
    %v1798 = vadd.f32 %v1744, %v1797
    %v1799 = vpop.f32.mrf.mxu0
    %1800 = vdwg.mxu0
    %s1802 = vtos %v104
    %v1803 = vstv %s1802
    %v1805 = vmul.f32 %v1803, %v1795
    %v1806 = vmul.f32 %v1803, %v1798
    %v1807 = vadd.f32 %v105, %v1805
    %v1808 = vadd.f32 %v106, %v1806
    %v1809 = vsel %vm107, %v1807, 0.0
    %1810 = vadd.xlane.f32.xlu0 %v1809
    %v1811 = vpop.xlane.xlu0 %1810
    %v1812 = vsel %vm107, %v1808, 0.0
    %1813 = vadd.xlane.f32.xlu0 %v1812
    %v1814 = vpop.xlane.xlu0 %1813
    %v1815 = vmul.f32 %v1811, %v114
    %v1816 = vmul.f32 %v1814, %v114
    %v1817 = vsub.f32 %v1807, %v1815
    %v1818 = vsub.f32 %v1808, %v1816
    %v1819 = vmul.f32 %v1817, %v1817
    %v1820 = vmul.f32 %v1818, %v1818
    %v1821 = vsel %vm107, %v1819, 0.0
    %1822 = vadd.xlane.f32.xlu0 %v1821
    %v1823 = vpop.xlane.xlu0 %1822
    %v1824 = vsel %vm107, %v1820, 0.0
    %1825 = vadd.xlane.f32.xlu0 %v1824
    %v1826 = vpop.xlane.xlu0 %1825
    %v1827 = vmul.f32 %v1823, %v114
    %v1828 = vmul.f32 %v1826, %v114
    %v1829 = vadd.f32 %v1827, 1e-06
    %v1830 = vadd.f32 %v1828, 1e-06
    %v1831 = vrsqrt.pop %v1829
    %v1832 = vrsqrt.pop %v1830
    %v1833 = vmul.f32 %v1817, %v1831
    %v1834 = vmul.f32 %v1818, %v1832
    %v1835 = vlaneseq
    %v1836 = vshrl.u32 %v1835, 7
    %v1837 = vsub.s32 0, %v1836
    %v1838 = vrot.slane %v88, %v1837
    %v1839 = vmul.f32 %v1833, %v1838
    %v1840 = vmul.f32 %v1834, %v1838
    %v1841 = vlaneseq
    %v1842 = vshrl.u32 %v1841, 7
    %v1843 = vsub.s32 0, %v1842
    %v1844 = vrot.slane %v89, %v1843
    %v1845 = vadd.f32 %v1839, %v1844
    %v1846 = vadd.f32 %v1840, %v1844
    %v1847 = vpack.c.bf16 %v1846, %v1845
    %v1848 = vld [vmem:[#allocation8] sm:$0xf]
    %v1849 = vld [vmem:[#allocation8 + $0x4] sm:$0xf]
    %v1850 = vld [vmem:[#allocation8 + $0x8] sm:$0xf]
    %v1851 = vld [vmem:[#allocation8 + $0xc] sm:$0xf]
    %v1852 = vlaneseq
    %v1853 = vshrl.u32 %v1852, 7
    %v1854 = vsub.s32 0, %v1853
    %v1855 = vrot.slane %v96, %v1854
    %v1860 = vunpack.c.l.b16 %v1848
    %v1861 = vunpack.c.l.b16 %v1849
    %v1862 = vunpack.c.l.b16 %v1850
    %v1863 = vunpack.c.l.b16 %v1851
    %v1864 = vpack.c.b16 %v1861, %v1860
    %v1865 = vpack.c.b16 %v1863, %v1862
    %v1869 = vsel %vm107, %v1847, 0
    %1871 = vmatprep.subr.bf16.mxu0 0
    %1872 = vmatpush1.bf16.msra.mxu0 0
    %1873 = vmatprep.subr.bf16.mxu0 0
    %1874 = vmatpush1.bf16.msra.mxu0 0
    %1875 = vmatprep.subr.bf16.mxu0 0
    %1876 = vmatpush1.bf16.msra.mxu0 0
    %1877 = vmatprep.subr.bf16.mxu0 0
    %1878 = vmatpush1.bf16.msra.mxu0 0
    %1879 = vmatprep.subr.bf16.mxu0 0
    %1880 = vmatpush1.bf16.msra.mxu0 0
    %1881 = vmatprep.subr.bf16.mxu0 0
    %1882 = vmatpush1.bf16.msra.mxu0 0
    %1883 = vmatprep.subr.bf16.mxu0 0
    %1884 = vmatpush1.bf16.msra.mxu0 %v1865
    %1885 = vmatprep.subr.bf16.mxu0 0
    %1886 = vmatpush1.bf16.msra.mxu0 %v1864
    %1887 = vmatprep.subr.bf16.mxu0 0
    %1888 = vmatpush2.bf16.msra.mxu0 0
    %1889 = vmatprep.subr.bf16.mxu0 0
    %1890 = vmatpush2.bf16.msra.mxu0 0
    %1891 = vmatprep.subr.bf16.mxu0 0
    %1892 = vmatpush2.bf16.msra.mxu0 0
    %1893 = vmatprep.subr.bf16.mxu0 0
    %1894 = vmatpush2.bf16.msra.mxu0 0
    %1895 = vmatprep.subr.bf16.mxu0 0
    %1896 = vmatpush2.bf16.msra.mxu0 0
    %1897 = vmatprep.subr.bf16.mxu0 0
    %1898 = vmatpush2.bf16.msra.mxu0 0
    %1899 = vmatprep.subr.bf16.mxu0 0
    %1900 = vmatpush2.bf16.msra.mxu0 0
    %1901 = vmatprep.subr.bf16.mxu0 0
    %1902 = vmatpush2.bf16.msra.mxu0 0
    %1903 = vmatprep.mubr.bf16.mxu0 0
    %1904 = vmatmul.mubr.bf16.gmra.mxu0 %v1869
    %v1905 = vpop.f32.mrf.mxu0
    %v1906 = vadd.f32 %v1855, %v1905
    %v1907 = vpop.f32.mrf.mxu0
    %v1908 = vpop.f32.mrf.mxu0
    %v1909 = vadd.f32 %v1855, %v1908
    %v1910 = vpop.f32.mrf.mxu0
    %1911 = vdwg.mxu0
    %v1912 = vmul.f32 %v1906, 0.5
    %v1913 = vmul.f32 %v1909, 0.5
    %v1914 = vmul.f32 %v1906, 0.044715
    %v1915 = vmul.f32 %v1909, 0.044715
    %v1916 = vmul.f32 %v1914, %v1906
    %v1917 = vmul.f32 %v1915, %v1909
    %v1918 = vmul.f32 %v1916, %v1906
    %v1919 = vmul.f32 %v1917, %v1909
    %v1920 = vadd.f32 %v1906, %v1918
    %v1921 = vadd.f32 %v1909, %v1919
    %v1922 = vmul.f32 %v1920, 0.7978846
    %v1923 = vmul.f32 %v1921, 0.7978846
    %v1924 = vtanh.pop %v1922
    %v1925 = vtanh.pop %v1923
    %v1926 = vadd.f32 %v1924, 1.0
    %v1927 = vadd.f32 %v1925, 1.0
    %v1928 = vmul.f32 %v1912, %v1926
    %v1929 = vmul.f32 %v1913, %v1927
    %v1930 = vpack.c.bf16 %v1929, %v1928
    %v1931 = vld [vmem:[%s6] sm:$0xf]
    %v1932 = vld [vmem:[%s6 + $0x4] sm:$0xf]
    %v1933 = vld [vmem:[%s6 + $0x8] sm:$0xf]
    %v1934 = vld [vmem:[%s6 + $0xc] sm:$0xf]
    %v1935 = vld [vmem:[%s6 + $0x10] sm:$0xf]
    %v1936 = vld [vmem:[%s6 + $0x14] sm:$0xf]
    %v1937 = vld [vmem:[%s6 + $0x18] sm:$0xf]
    %v1938 = vld [vmem:[%s6 + $0x1c] sm:$0xf]
    %v1939 = vlaneseq
    %v1940 = vshrl.u32 %v1939, 7
    %v1941 = vsub.s32 0, %v1940
    %v1942 = vrot.slane %v97, %v1941
    %v1951 = vunpack.c.l.b16 %v1931
    %v1952 = vunpack.c.l.b16 %v1932
    %v1953 = vunpack.c.l.b16 %v1933
    %v1954 = vunpack.c.l.b16 %v1934
    %v1955 = vunpack.c.l.b16 %v1935
    %v1956 = vunpack.c.l.b16 %v1936
    %v1957 = vunpack.c.l.b16 %v1937
    %v1958 = vunpack.c.l.b16 %v1938
    %v1959 = vpack.c.b16 %v1952, %v1951
    %v1960 = vpack.c.b16 %v1954, %v1953
    %v1961 = vpack.c.b16 %v1956, %v1955
    %v1962 = vpack.c.b16 %v1958, %v1957
    %vm1967 = vcmask 523264
    %v1969 = vsel %vm1967, %v1930, 0
    %1971 = vmatprep.subr.bf16.mxu0 0
    %1972 = vmatpush1.bf16.msra.mxu0 0
    %1973 = vmatprep.subr.bf16.mxu0 0
    %1974 = vmatpush1.bf16.msra.mxu0 0
    %1975 = vmatprep.subr.bf16.mxu0 0
    %1976 = vmatpush1.bf16.msra.mxu0 0
    %1977 = vmatprep.subr.bf16.mxu0 0
    %1978 = vmatpush1.bf16.msra.mxu0 0
    %1979 = vmatprep.subr.bf16.mxu0 0
    %1980 = vmatpush1.bf16.msra.mxu0 %v1962
    %1981 = vmatprep.subr.bf16.mxu0 0
    %1982 = vmatpush1.bf16.msra.mxu0 %v1961
    %1983 = vmatprep.subr.bf16.mxu0 0
    %1984 = vmatpush1.bf16.msra.mxu0 %v1960
    %1985 = vmatprep.subr.bf16.mxu0 0
    %1986 = vmatpush1.bf16.msra.mxu0 %v1959
    %1987 = vmatprep.subr.bf16.mxu0 0
    %1988 = vmatpush2.bf16.msra.mxu0 0
    %1989 = vmatprep.subr.bf16.mxu0 0
    %1990 = vmatpush2.bf16.msra.mxu0 0
    %1991 = vmatprep.subr.bf16.mxu0 0
    %1992 = vmatpush2.bf16.msra.mxu0 0
    %1993 = vmatprep.subr.bf16.mxu0 0
    %1994 = vmatpush2.bf16.msra.mxu0 0
    %1995 = vmatprep.subr.bf16.mxu0 0
    %1996 = vmatpush2.bf16.msra.mxu0 0
    %1997 = vmatprep.subr.bf16.mxu0 0
    %1998 = vmatpush2.bf16.msra.mxu0 0
    %1999 = vmatprep.subr.bf16.mxu0 0
    %2000 = vmatpush2.bf16.msra.mxu0 0
    %2001 = vmatprep.subr.bf16.mxu0 0
    %2002 = vmatpush2.bf16.msra.mxu0 0
    %2003 = vmatprep.mubr.bf16.mxu0 0
    %2004 = vmatmul.mubr.bf16.gmra.mxu0 %v1969
    %v2005 = vpop.f32.mrf.mxu0
    %v2006 = vadd.f32 %v1942, %v2005
    %v2007 = vpop.f32.mrf.mxu0
    %v2008 = vpop.f32.mrf.mxu0
    %v2009 = vadd.f32 %v1942, %v2008
    %v2010 = vpop.f32.mrf.mxu0
    %2011 = vdwg.mxu0
    %2012 = vrot.lane.b32.xlu0 %v104, 127
    %v2013 = vpop.permute.xlu0 %2012
    %s2014 = vtos %v2013
    %v2015 = vstv %s2014
    %v2017 = vmul.f32 %v2015, %v2006
    %v2018 = vmul.f32 %v2015, %v2009
    %v2019 = vadd.f32 %v1807, %v2017
    %v2020 = vadd.f32 %v1808, %v2018
    %2021 = vst.msk [vmem:[#allocation10] sm:$0xff] %vm107, %v2019
    %2022 = vst.msk [vmem:[#allocation10 + $0x8] sm:$0xff] %vm107, %v2020
    // Predicated region
    $region50: #{cross_attention_layer.1} parent=1 // pred_check
      _
    $region51: #{cross_attention_layer.1} parent=1 // pred_check_branch
      %2024 = sbr.rel (0) target = $region53
    $region52: #{cross_attention_layer.1} parent=1 // pred_region
      %s2026 = ssub.s32 256, 256
      %2027 = vsyncadd [#allocation4], %s2026
      %s2028 = sshll.u32 [#allocation10], 4
      %s2029 = int_to_ptr.vmem [resolvable:$true] %s2028
      %2034 = dma.vmem_to_hbm [thread:$0]  %s2029, 256, %s8, [#allocation4], 128, 128, 8
    $region53: #{cross_attention_layer.1} parent=1 // pred_fallthru
      _
    // Predicated region
    $region54: #{cross_attention_layer.1} parent=1 // pred_check
      _
    $region55: #{cross_attention_layer.1} parent=1 // pred_check_branch
      %2036 = sbr.rel (0) target = $region57
    $region56: #{cross_attention_layer.1} parent=1 // pred_region
      %2037 = dma.done [#allocation4], 256
    $region57: #{cross_attention_layer.1} parent=1 // pred_fallthru
      _
    %2038 = vsyncpa [#allocation3], 1
    %2039 = vsyncpa [#allocation6], 1
    %2040 = vsyncpa [#allocation9], 1
    %2041 = vsyncpa [#allocation4], 1

</llo_original>
